<compile_context>
chip_gen: v7x
topology: tpu7x:2x2x1
jax: 0.10.0
libtpu: 0.0.40
codegen_flags: <defaults>
</compile_context>

<pallas_src>
import functools

import jax
import jax.numpy as jnp
from jax.experimental import pallas as pl
from jax.experimental.pallas import tpu as pltpu


_EPS = 1e-5
_SQRT_HALF = 0.7071067811865476
_MATMUL_DTYPE = jnp.bfloat16   # MXU input dtype; accumulation is always f32
_EXACT_SOFTMAX = False         # True -> exact VPU divide instead of EUP approx reciprocal


def _pick_vmem_limit():
    """Generation-aware VMEM request: ~3/4 of physical, capped at 100 MiB."""
    cap = None
    try:
        info = pltpu.get_tpu_info()
        cap = getattr(info, "vmem_capacity_bytes", None)
    except Exception:
        cap = None
    if not cap:
        return 64 * 1024 * 1024
    return int(min(100 * 1024 * 1024, (cap * 3) // 4))


_VMEM_LIMIT = _pick_vmem_limit()


def _cparams(dims):
    return pltpu.CompilerParams(dimension_semantics=dims,
                                vmem_limit_bytes=_VMEM_LIMIT)


# ----------------------------------------------------------------- BlockSpecs

def _full1(a):                      # grid rank 1, grid-invariant block
    zero = (0,) * a.ndim
    return pl.BlockSpec(a.shape, lambda b: zero)


def _full2(a):                      # grid rank 2, grid-invariant block
    zero = (0,) * a.ndim
    return pl.BlockSpec(a.shape, lambda b, i: zero)


def _batched1(a):                   # grid rank 1, one batch element per step
    tail = (0,) * (a.ndim - 1)
    return pl.BlockSpec((1,) + a.shape[1:], lambda b: (b,) + tail)


def _batched2(a):                   # grid rank 2, batched over axis 0 only
    tail = (0,) * (a.ndim - 1)
    return pl.BlockSpec((1,) + a.shape[1:], lambda b, i: (b,) + tail)


# --------------------------------------------------------------- math helpers

def _ln(x, g, b):
    """LayerNorm over the last dim (f32 statistics).  x: (N, C); g, b: (1, C)."""
    x = x.astype(jnp.float32)
    mu = jnp.mean(x, axis=-1, keepdims=True)
    var = jnp.mean(jnp.square(x - mu), axis=-1, keepdims=True)
    return (x - mu) * jax.lax.rsqrt(var + _EPS) * g + b


def _split_heads(x, num_heads):
    """(N, C) -> (H, N, hd): lane slices stacked on a new leading (batch) axis."""
    n, c = x.shape
    hd = c // num_heads
    return jnp.stack([x[:, h * hd:(h + 1) * hd] for h in range(num_heads)], axis=0)


def _attention(q_all, k_all, v_all, wp, bp, num_heads):
    """q_all (N,C), k_all/v_all (M,C) in matmul dtype; softmax scale already
    folded into the q projection.  Returns (N, C) f32."""
    qh = _split_heads(q_all, num_heads)          # (H, N, hd)
    kh = _split_heads(k_all, num_heads)          # (H, M, hd)
    vh = _split_heads(v_all, num_heads)          # (H, M, hd)

    s = jnp.einsum("hnd,hmd->hnm", qh, kh, preferred_element_type=jnp.float32)
    s = s - jnp.max(s, axis=-1, keepdims=True)
    p = jnp.exp(s)
    denom = jnp.sum(p, axis=-1, keepdims=True)
    if _EXACT_SOFTMAX:
        p = p / denom
    else:
        # approx reciprocal rides the EUP slot; error ~1e-3 rel, far below the
        # bf16 matmul noise already accepted for this kernel.
        p = p * pl.reciprocal(denom, approx=True)

    o = jnp.einsum("hnm,hmd->hnd", p.astype(vh.dtype), vh,
                   preferred_element_type=jnp.float32)        # (H, N, hd) f32

    # merge heads on the lane dim -> ONE dense (N,C)@(C,C) projection
    # (full-C MXU contraction, no (H,N,C) intermediate, no per-head sum).
    o_m = jnp.concatenate([o[h] for h in range(num_heads)], axis=-1)
    return jnp.dot(o_m.astype(wp.dtype), wp,
                   preferred_element_type=jnp.float32) + bp


def _self_mha(nq, wqkv, wp, bp, num_heads):
    c = nq.shape[-1]
    x = nq.astype(wqkv.dtype)
    qkv = jnp.dot(x, wqkv, preferred_element_type=jnp.float32).astype(wqkv.dtype)
    return _attention(qkv[:, :c], qkv[:, c:2 * c], qkv[:, 2 * c:],
                      wp, bp, num_heads)


def _cross_mha(nq, nv, wq, wkv, wp, bp, num_heads):
    c = nq.shape[-1]
    q_all = jnp.dot(nq.astype(wq.dtype), wq,
                    preferred_element_type=jnp.float32).astype(wq.dtype)
    kv = jnp.dot(nv.astype(wkv.dtype), wkv,
                 preferred_element_type=jnp.float32).astype(wkv.dtype)
    return _attention(q_all, kv[:, :c], kv[:, c:], wp, bp, num_heads)


def _gelu(h):
    return 0.5 * h * (1.0 + jax.lax.erf(h * _SQRT_HALF))      # exact (erf) GELU


def _mlp(x, g, b, w1, b1, w2, b2):
    nrm = _ln(x, g, b)
    h = jnp.dot(nrm.astype(w1.dtype), w1, preferred_element_type=jnp.float32) + b1
    h = _gelu(h)
    return jnp.dot(h.astype(w2.dtype), w2, preferred_element_type=jnp.float32) + b2


# --------------------------------------------------------------------- kernels

def _self_attn_res_kernel(num_heads, q_ref, g_ref, b_ref, wqkv_ref, wp_ref,
                          bp_ref, o_ref):
    # out = q + SelfAttn(LN1(q))
    nq = _ln(q_ref[0], g_ref[...], b_ref[...])
    a = _self_mha(nq, wqkv_ref[...], wp_ref[...], bp_ref[...], num_heads)
    o_ref[0] = (q_ref[0].astype(jnp.float32) + a).astype(o_ref.dtype)


def _self_attn_knn_kernel(num_heads, q_ref, g_ref, b_ref, wqkv_ref, wp_ref,
                          bp_ref, attn_ref, norm_ref):
    # emits the attention branch output AND norm_q (needed by the knn gather)
    nq = _ln(q_ref[0], g_ref[...], b_ref[...])
    a = _self_mha(nq, wqkv_ref[...], wp_ref[...], bp_ref[...], num_heads)
    attn_ref[0] = a.astype(attn_ref.dtype)
    norm_ref[0] = nq.astype(norm_ref.dtype)


def _cross_attn_knn_kernel(num_heads, q_ref, v_ref, gq_ref, bq_ref, gv_ref,
                           bv_ref, wq_ref, wkv_ref, wp_ref, bp_ref,
                           attn_ref, normq_ref, normv_ref):
    nq = _ln(q_ref[0], gq_ref[...], bq_ref[...])
    nv = _ln(v_ref[0], gv_ref[...], bv_ref[...])
    a = _cross_mha(nq, nv, wq_ref[...], wkv_ref[...], wp_ref[...], bp_ref[...],
                   num_heads)
    attn_ref[0] = a.astype(attn_ref.dtype)
    normq_ref[0] = nq.astype(normq_ref.dtype)
    normv_ref[0] = nv.astype(normv_ref.dtype)


def _cross_attn_mlp_res_kernel(num_heads, q_ref, v_ref, gq_ref, bq_ref, gv_ref,
                               bv_ref, wq_ref, wkv_ref, wp_ref, bp_ref,
                               g2_ref, b2_ref, w1_ref, b1_ref, w2_ref, b2f_ref,
                               o_ref):
    # non-knn path, fused:  q1 = q + CrossAttn(LNq(q), LNv(v));
    #                       out = q1 + MLP(LN2(q1))
    q0 = q_ref[0].astype(jnp.float32)
    nq = _ln(q0, gq_ref[...], bq_ref[...])
    nv = _ln(v_ref[0], gv_ref[...], bv_ref[...])
    a = _cross_mha(nq, nv, wq_ref[...], wkv_ref[...], wp_ref[...], bp_ref[...],
                   num_heads)
    q1 = q0 + a
    out = _mlp(q1, g2_ref[...], b2_ref[...], w1_ref[...], b1_ref[...],
               w2_ref[...], b2f_ref[...])
    o_ref[0] = (q1 + out).astype(o_ref.dtype)


def _knn_merge_res_kernel(f_ref, xq_ref, q1_ref, res_ref,
                          w1a_ref, w1d_ref, b1_ref, wma_ref, wmb_ref, bm_ref,
                          o_ref, base_sc, max_sc):
    # grid = (B, K); one (N, C) neighbour slab per step, running max in VMEM.
    kk = pl.program_id(1)

    @pl.when(kk == 0)
    def _():
        # [f - xq, xq] @ W1 + b1  ==  f @ W1_top + xq @ (W1_bot - W1_top) + b1;
        # the xq term is K-invariant -> computed once into a scratch.
        xq = xq_ref[0].astype(w1d_ref.dtype)
        base_sc[...] = (jnp.dot(xq, w1d_ref[...],
                                preferred_element_type=jnp.float32)
                        + b1_ref[...])
        max_sc[...] = jnp.full(max_sc.shape, -jnp.inf, jnp.float32)

    f = f_ref[0, 0].astype(w1a_ref.dtype)                       # (N, C)
    h = jnp.dot(f, w1a_ref[...], preferred_element_type=jnp.float32) + base_sc[...]
    h = jnp.maximum(h, 0.2 * h)                                 # LeakyReLU(0.2)
    max_sc[...] = jnp.maximum(max_sc[...], h)

    @pl.when(kk == pl.num_programs(1) - 1)
    def _():
        # merge_map([q1, m]) == q1 @ Wm_top + m @ Wm_bot + bm   (no concat)
        q1 = q1_ref[0].astype(wma_ref.dtype)
        m = max_sc[...].astype(wmb_ref.dtype)
        out = (jnp.dot(q1, wma_ref[...], preferred_element_type=jnp.float32)
               + jnp.dot(m, wmb_ref[...], preferred_element_type=jnp.float32)
               + bm_ref[...])
        o_ref[0] = (res_ref[0].astype(jnp.float32) + out).astype(o_ref.dtype)


def _mlp_res_kernel(q_ref, g_ref, b_ref, w1_ref, b1_ref, w2_ref, b2_ref, o_ref):
    # out = q + fc2(GELU(fc1(LN2(q))))
    x = q_ref[0]
    out = _mlp(x, g_ref[...], b_ref[...], w1_ref[...], b1_ref[...],
               w2_ref[...], b2_ref[...])
    o_ref[0] = (x.astype(jnp.float32) + out).astype(o_ref.dtype)


# -------------------------------------------------------------------- wrappers

def fused_self_attention(q, g, b, wqkv, wp, bp, num_heads, *, with_knn):
    B, N, C = q.shape
    args = (q, g, b, wqkv, wp, bp)
    in_specs = [_batched1(q)] + [_full1(a) for a in args[1:]]
    if with_knn:
        kernel = functools.partial(_self_attn_knn_kernel, num_heads)
        out_shape = (jax.ShapeDtypeStruct((B, N, C), q.dtype),
                     jax.ShapeDtypeStruct((B, N, C), q.dtype))
        out_specs = (_batched1(q), _batched1(q))
    else:
        kernel = functools.partial(_self_attn_res_kernel, num_heads)
        out_shape = jax.ShapeDtypeStruct((B, N, C), q.dtype)
        out_specs = _batched1(q)
    return pl.pallas_call(kernel, out_shape=out_shape, grid=(B,),
                          in_specs=in_specs, out_specs=out_specs,
                          compiler_params=_cparams(("parallel",)))(*args)


def fused_cross_attention_knn(q, v, gq, bq, gv, bv, wq, wkv, wp, bp, num_heads):
    B, N, C = q.shape
    NK = v.shape[1]
    args = (q, v, gq, bq, gv, bv, wq, wkv, wp, bp)
    in_specs = [_batched1(q), _batched1(v)] + [_full1(a) for a in args[2:]]
    out_shape = (jax.ShapeDtypeStruct((B, N, C), q.dtype),
                 jax.ShapeDtypeStruct((B, N, C), q.dtype),
                 jax.ShapeDtypeStruct((B, NK, C), v.dtype))
    out_specs = (_batched1(q), _batched1(q), _batched1(v))
    kernel = functools.partial(_cross_attn_knn_kernel, num_heads)
    return pl.pallas_call(kernel, out_shape=out_shape, grid=(B,),
                          in_specs=in_specs, out_specs=out_specs,
                          compiler_params=_cparams(("parallel",)))(*args)


def fused_cross_attention_mlp(q, v, gq, bq, gv, bv, wq, wkv, wp, bp,
                              g2, b2, w1, b1, w2, b2f, num_heads):
    B, N, C = q.shape
    args = (q, v, gq, bq, gv, bv, wq, wkv, wp, bp, g2, b2, w1, b1, w2, b2f)
    in_specs = [_batched1(q), _batched1(v)] + [_full1(a) for a in args[2:]]
    kernel = functools.partial(_cross_attn_mlp_res_kernel, num_heads)
    return pl.pallas_call(kernel,
                          out_shape=jax.ShapeDtypeStruct((B, N, C), q.dtype),
                          grid=(B,), in_specs=in_specs, out_specs=_batched1(q),
                          compiler_params=_cparams(("parallel",)))(*args)


def fused_knn_merge_residual(f, xq, q1, res, w1a, w1d, b1, wma, wmb, bm):
    B, K, N, C = f.shape
    in_specs = ([pl.BlockSpec((1, 1, N, C), lambda b, k: (b, k, 0, 0)),
                 _batched2(xq), _batched2(q1), _batched2(res)]
                + [_full2(a) for a in (w1a, w1d, b1, wma, wmb, bm)])
    return pl.pallas_call(
        _knn_merge_res_kernel,
        out_shape=jax.ShapeDtypeStruct((B, N, C), res.dtype),
        grid=(B, K),
        in_specs=in_specs,
        out_specs=pl.BlockSpec((1, N, C), lambda b, k: (b, 0, 0)),
        scratch_shapes=[pltpu.VMEM((N, C), jnp.float32),   # K-invariant xq term
                        pltpu.VMEM((N, C), jnp.float32)],  # running max over K
        compiler_params=_cparams(("parallel", "arbitrary")),
    )(f, xq, q1, res, w1a, w1d, b1, wma, wmb, bm)


def fused_mlp_residual(q, g, b, w1, b1, w2, b2, *, tn=512):
    B, N, C = q.shape
    tn = N if N <= tn else tn
    grid = (B, pl.cdiv(N, tn))
    in_specs = [pl.BlockSpec((1, tn, C), lambda bb, i: (bb, i, 0))] + [
        _full2(a) for a in (g, b, w1, b1, w2, b2)]
    return pl.pallas_call(
        _mlp_res_kernel,
        out_shape=jax.ShapeDtypeStruct((B, N, C), q.dtype),
        grid=grid, in_specs=in_specs,
        out_specs=pl.BlockSpec((1, tn, C), lambda bb, i: (bb, i, 0)),
        compiler_params=_cparams(("parallel", "parallel")),
    )(q, g, b, w1, b1, w2, b2)


def gather_knn_rows(x, knn_index, num_query, k):
    """x: (B, Np, C); knn_index: (B*k*num_query,) int32 into the batch-flattened
    token array (per-batch offsets already included, like the PyTorch ref).
    Returns raw gathered rows (B, k, num_query, C) in bf16; the
    cat(f - xq, xq) of get_graph_feature is folded into the knn kernel."""
    B, Np, C = x.shape
    f = x.reshape(B * Np, C)[knn_index]
    # TODO(synk): move this gather in-kernel (scalar-prefetched indices + DMA
    # row gather from a pl.ANY ref) so (B, K, N, C) never materialises in HBM.
    return f.reshape(B, k, num_query, C).astype(_MATMUL_DTYPE)


# --------------------------------------------------------------------- forward

def decoder_block_forward(params, q, v, self_knn_index=None, cross_knn_index=None,
                          num_heads=4, k=8):
    B, N, C = q.shape
    assert C % num_heads == 0
    scale = float(C // num_heads) ** -0.5
    mdt = _MATMUL_DTYPE

    def vec(p):
        return p.reshape(1, -1).astype(jnp.float32)

    # ---- host-side weight prep: lane-dense layouts, softmax scale folded into
    #      the Q projections, bf16 casts (f32 accumulation in-kernel) ----------
    wqkv = params["qkv_w"]
    wqkv = jnp.concatenate([wqkv[:, :C] * scale, wqkv[:, C:]], axis=1).astype(mdt)
    sa_wp = params["sa_proj_w"].astype(mdt)
    sa_bp = vec(params["sa_proj_b"])

    ca_wq = (params["ca_q_w"] * scale).astype(mdt)
    ca_wkv = jnp.concatenate([params["ca_k_w"], params["ca_v_w"]], axis=1).astype(mdt)
    ca_wp = params["ca_proj_w"].astype(mdt)
    ca_bp = vec(params["ca_proj_b"])

    fc1_w = params["fc1_w"].astype(mdt)
    fc1_b = vec(params["fc1_b"])
    fc2_w = params["fc2_w"].astype(mdt)
    fc2_b = vec(params["fc2_b"])

    n1g, n1b = vec(params["norm1_g"]), vec(params["norm1_b"])
    nqg, nqb = vec(params["normq_g"]), vec(params["normq_b"])
    nvg, nvb = vec(params["normv_g"]), vec(params["normv_b"])
    n2g, n2b = vec(params["norm2_g"]), vec(params["norm2_b"])

    def split_knn(w):     # [f-xq, xq] @ W  ==  f@W_top + xq@(W_bot - W_top)
        return w[:C].astype(mdt), (w[C:] - w[:C]).astype(mdt)

    def split_merge(w):   # [q1, m] @ W  ==  q1@W_top + m@W_bot
        return w[:C].astype(mdt), w[C:].astype(mdt)

    # ----- self-attention branch: q = q + [knn-merge of] SelfAttn(LN1(q)) -----
    if self_knn_index is not None:
        attn1, norm_q = fused_self_attention(q, n1g, n1b, wqkv, sa_wp, sa_bp,
                                             num_heads, with_knn=True)
        f = gather_knn_rows(norm_q, self_knn_index, N, k)
        w1a, w1d = split_knn(params["knn_w"])
        wma, wmb = split_merge(params["merge_w"])
        q = fused_knn_merge_residual(f, norm_q, attn1, q, w1a, w1d,
                                     vec(params["knn_b"]), wma, wmb,
                                     vec(params["merge_b"]))
    else:
        q = fused_self_attention(q, n1g, n1b, wqkv, sa_wp, sa_bp,
                                 num_heads, with_knn=False)

    # ----- cross-attention (+ fused MLP when there is no knn branch) ----------
    if cross_knn_index is not None:
        attn2, norm_q2, norm_v = fused_cross_attention_knn(
            q, v, nqg, nqb, nvg, nvb, ca_wq, ca_wkv, ca_wp, ca_bp, num_heads)
        f = gather_knn_rows(norm_v, cross_knn_index, N, k)
        w1a, w1d = split_knn(params["knnx_w"])
        wma, wmb = split_merge(params["mergex_w"])
        q = fused_knn_merge_residual(f, norm_q2, attn2, q, w1a, w1d,
                                     vec(params["knnx_b"]), wma, wmb,
                                     vec(params["mergex_b"]))
        q = fused_mlp_residual(q, n2g, n2b, fc1_w, fc1_b, fc2_w, fc2_b)
    else:
        q = fused_cross_attention_mlp(q, v, nqg, nqb, nvg, nvb, ca_wq, ca_wkv,
                                      ca_wp, ca_bp, n2g, n2b, fc1_w, fc1_b,
                                      fc2_w, fc2_b, num_heads)
    return q


# ---------------------------------------------------------- pure-JAX reference

def reference_forward(params, q, v, self_knn_index, cross_knn_index,
                      num_heads, knn_k):
    """Straight port of the PyTorch DecoderBlock (f32, no Pallas)."""
    B, N, C = q.shape
    H = num_heads
    hd = C // H
    scale = float(hd) ** -0.5

    def ln(x, g, b):
        mu = x.mean(-1, keepdims=True)
        var = ((x - mu) ** 2).mean(-1, keepdims=True)
        return (x - mu) / jnp.sqrt(var + _EPS) * g + b

    def heads(t, n):
        return t.reshape(B, n, H, hd).transpose(0, 2, 1, 3)

    def self_attention(x):
        qkv = x @ params["qkv_w"]
        qq = heads(qkv[..., :C], N)
        kk = heads(qkv[..., C:2 * C], N)
        vv = heads(qkv[..., 2 * C:], N)
        attn = jax.nn.softmax(qq @ kk.transpose(0, 1, 3, 2) * scale, axis=-1)
        o = (attn @ vv).transpose(0, 2, 1, 3).reshape(B, N, C)
        return o @ params["sa_proj_w"] + params["sa_proj_b"]

    def cross_attention(xq, xv):
        NK = xv.shape[1]
        qq = heads(xq @ params["ca_q_w"], N)
        kk = heads(xv @ params["ca_k_w"], NK)
        vv = heads(xv @ params["ca_v_w"], NK)
        attn = jax.nn.softmax(qq @ kk.transpose(0, 1, 3, 2) * scale, axis=-1)
        o = (attn @ vv).transpose(0, 2, 1, 3).reshape(B, N, C)
        return o @ params["ca_proj_w"] + params["ca_proj_b"]

    def graph_feature(x, idx, xq):
        Np = x.shape[1]
        nq = xq.shape[1]
        f = x.reshape(B * Np, C)[idx].reshape(B, knn_k, nq, C)
        xx = jnp.broadcast_to(xq[:, None], (B, knn_k, nq, C))
        return jnp.concatenate([f - xx, xx], axis=-1)

    norm_q = ln(q, params["norm1_g"], params["norm1_b"])
    q1 = self_attention(norm_q)
    if self_knn_index is not None:
        f = graph_feature(norm_q, self_knn_index, norm_q)
        f = f @ params["knn_w"] + params["knn_b"]
        f = jnp.where(f >= 0, f, 0.2 * f)
        f = f.max(axis=1)
        q1 = jnp.concatenate([q1, f], axis=-1) @ params["merge_w"] + params["merge_b"]
    q = q + q1

    norm_q = ln(q, params["normq_g"], params["normq_b"])
    norm_v = ln(v, params["normv_g"], params["normv_b"])
    q2 = cross_attention(norm_q, norm_v)
    if cross_knn_index is not None:
        f = graph_feature(norm_v, cross_knn_index, norm_q)
        f = f @ params["knnx_w"] + params["knnx_b"]
        f = jnp.where(f >= 0, f, 0.2 * f)
        f = f.max(axis=1)
        q2 = jnp.concatenate([q2, f], axis=-1) @ params["mergex_w"] + params["mergex_b"]
    q = q + q2

    n2 = ln(q, params["norm2_g"], params["norm2_b"])
    h = n2 @ params["fc1_w"] + params["fc1_b"]
    h = 0.5 * h * (1.0 + jax.lax.erf(h * _SQRT_HALF))
    return q + (h @ params["fc2_w"] + params["fc2_b"])


# ----------------------------------------------------------------------- setup

def init_params(key, dim, num_heads, mlp_ratio=4.0):
    hidden = int(dim * mlp_ratio)
    keys = jax.random.split(key, 12)
    std = 0.02

    def w(kk, shape):
        return jax.random.normal(kk, shape, jnp.float32) * std

    return {
        "norm1_g": jnp.ones((dim,), jnp.float32), "norm1_b": jnp.zeros((dim,), jnp.float32),
        "normq_g": jnp.ones((dim,), jnp.float32), "normq_b": jnp.zeros((dim,), jnp.float32),
        "normv_g": jnp.ones((dim,), jnp.float32), "normv_b": jnp.zeros((dim,), jnp.float32),
        "norm2_g": jnp.ones((dim,), jnp.float32), "norm2_b": jnp.zeros((dim,), jnp.float32),
        "qkv_w": w(keys[0], (dim, 3 * dim)),                       # qkv_bias=False
        "sa_proj_w": w(keys[1], (dim, dim)), "sa_proj_b": jnp.zeros((dim,), jnp.float32),
        "ca_q_w": w(keys[2], (dim, dim)),
        "ca_k_w": w(keys[3], (dim, dim)),
        "ca_v_w": w(keys[4], (dim, dim)),
        "ca_proj_w": w(keys[5], (dim, dim)), "ca_proj_b": jnp.zeros((dim,), jnp.float32),
        "knn_w": w(keys[6], (2 * dim, dim)), "knn_b": jnp.zeros((dim,), jnp.float32),
        "merge_w": w(keys[7], (2 * dim, dim)), "merge_b": jnp.zeros((dim,), jnp.float32),
        "knnx_w": w(keys[8], (2 * dim, dim)), "knnx_b": jnp.zeros((dim,), jnp.float32),
        "mergex_w": w(keys[9], (2 * dim, dim)), "mergex_b": jnp.zeros((dim,), jnp.float32),
        "fc1_w": w(keys[10], (dim, hidden)), "fc1_b": jnp.zeros((hidden,), jnp.float32),
        "fc2_w": w(keys[11], (hidden, dim)), "fc2_b": jnp.zeros((dim,), jnp.float32),
    }


if __name__ == "__main__":
    B, N, NK, C, H, K = 2, 8, 16, 32, 4, 8

    key = jax.random.PRNGKey(0)
    kq, kv, kp, ki1, ki2 = jax.random.split(key, 5)

    q = jax.random.normal(kq, (B, N, C), jnp.float32)
    v = jax.random.normal(kv, (B, NK, C), jnp.float32)
    params = init_params(kp, C, H)

    # knn indices index the batch-flattened token array; per-batch offsets are
    # already applied (this matches the PyTorch reference's get_graph_feature).
    self_idx = jax.random.randint(ki1, (B, K, N), 0, N) + (jnp.arange(B) * N)[:, None, None]
    self_knn_index = self_idx.reshape(-1).astype(jnp.int32)        # (B*K*N,)
    cross_idx = jax.random.randint(ki2, (B, K, N), 0, NK) + (jnp.arange(B) * NK)[:, None, None]
    cross_knn_index = cross_idx.reshape(-1).astype(jnp.int32)      # (B*K*N,)

    out_knn = decoder_block_forward(params, q, v, self_knn_index, cross_knn_index,
                                    num_heads=H, k=K)
    out_plain = decoder_block_forward(params, q, v, None, None, num_heads=H, k=K)
    jax.block_until_ready((out_knn, out_plain))

    ref_knn = reference_forward(params, q, v, self_knn_index, cross_knn_index, H, K)
    ref_plain = reference_forward(params, q, v, None, None, H, K)

    assert out_knn.shape == (B, N, C) and out_plain.shape == (B, N, C)
    assert bool(jnp.all(jnp.isfinite(out_knn))) and bool(jnp.all(jnp.isfinite(out_plain)))
    err_knn = float(jnp.max(jnp.abs(out_knn - ref_knn)))
    err_plain = float(jnp.max(jnp.abs(out_plain - ref_plain)))
    # bf16 matmuls with f32 accumulation: expected error << 5e-2 at these scales
    assert err_knn < 5e-2 and err_plain < 5e-2, (err_knn, err_plain)
    print("KERNEL_OK")
</pallas_src>

<mosaic_0001>
module attributes {stable_mosaic.version = 11 : i64} {
  func.func @_self_attn_knn_kernel(%arg0: i32, %arg1: memref<1x8x32xf32, #tpu.memory_space<vmem>>, %arg2: memref<1x32xf32, #tpu.memory_space<vmem>>, %arg3: memref<1x32xf32, #tpu.memory_space<vmem>>, %arg4: memref<32x96xbf16, #tpu.memory_space<vmem>>, %arg5: memref<32x32xbf16, #tpu.memory_space<vmem>>, %arg6: memref<1x32xf32, #tpu.memory_space<vmem>>, %arg7: memref<1x8x32xf32, #tpu.memory_space<vmem>>, %arg8: memref<1x8x32xf32, #tpu.memory_space<vmem>>) attributes {dimension_semantics = [#tpu.dimension_semantics<parallel>], iteration_bounds = array<i64: 2>, scalar_prefetch = 0 : i64, scratch_operands = 0 : i64, tpu.core_type = #tpu.core_type<tc>, window_params = [{transform_indices = @transform_0, window_bounds = array<i64: 1, 8, 32>}, {pipeline_mode = #tpu.pipeline_mode<synchronous>, transform_indices = @transform_1, window_bounds = array<i64: 1, 32>}, {pipeline_mode = #tpu.pipeline_mode<synchronous>, transform_indices = @transform_2, window_bounds = array<i64: 1, 32>}, {pipeline_mode = #tpu.pipeline_mode<synchronous>, transform_indices = @transform_3, window_bounds = array<i64: 32, 96>}, {pipeline_mode = #tpu.pipeline_mode<synchronous>, transform_indices = @transform_4, window_bounds = array<i64: 32, 32>}, {pipeline_mode = #tpu.pipeline_mode<synchronous>, transform_indices = @transform_5, window_bounds = array<i64: 1, 32>}, {transform_indices = @transform_6, window_bounds = array<i64: 1, 8, 32>}, {transform_indices = @transform_7, window_bounds = array<i64: 1, 8, 32>}]} {
    %c0 = arith.constant 0 : index
    %c0_0 = arith.constant 0 : index
    %c0_1 = arith.constant 0 : index
    %0 = vector.load %arg1[%c0, %c0_0, %c0_1] : memref<1x8x32xf32, #tpu.memory_space<vmem>>, vector<1x8x32xf32>
    %1 = vector.shape_cast %0 : vector<1x8x32xf32> to vector<8x32xf32>
    %c0_2 = arith.constant 0 : index
    %c0_3 = arith.constant 0 : index
    %2 = vector.load %arg2[%c0_2, %c0_3] : memref<1x32xf32, #tpu.memory_space<vmem>>, vector<1x32xf32>
    %c0_4 = arith.constant 0 : index
    %c0_5 = arith.constant 0 : index
    %3 = vector.load %arg3[%c0_4, %c0_5] : memref<1x32xf32, #tpu.memory_space<vmem>>, vector<1x32xf32>
    %cst = arith.constant dense<0.000000e+00> : vector<8xf32>
    %4 = vector.multi_reduction <add>, %1, %cst [1] : vector<8x32xf32> to vector<8xf32>
    %5 = vector.shape_cast %4 : vector<8xf32> to vector<8x1xf32>
    %cst_6 = arith.constant 3.200000e+01 : f32
    %6 = vector.broadcast %cst_6 : f32 to vector<8x1xf32>
    %7 = arith.divf %5, %6 : vector<8x1xf32>
    %8 = vector.broadcast %7 : vector<8x1xf32> to vector<8x32xf32>
    %9 = arith.subf %1, %8 : vector<8x32xf32>
    %10 = arith.mulf %9, %9 : vector<8x32xf32>
    %cst_7 = arith.constant dense<0.000000e+00> : vector<8xf32>
    %11 = vector.multi_reduction <add>, %10, %cst_7 [1] : vector<8x32xf32> to vector<8xf32>
    %12 = vector.shape_cast %11 : vector<8xf32> to vector<8x1xf32>
    %cst_8 = arith.constant 3.200000e+01 : f32
    %13 = vector.broadcast %cst_8 : f32 to vector<8x1xf32>
    %14 = arith.divf %12, %13 : vector<8x1xf32>
    %15 = vector.broadcast %7 : vector<8x1xf32> to vector<8x32xf32>
    %16 = arith.subf %1, %15 : vector<8x32xf32>
    %cst_9 = arith.constant 9.99999974E-6 : f32
    %17 = vector.broadcast %cst_9 : f32 to vector<8x1xf32>
    %18 = arith.addf %14, %17 : vector<8x1xf32>
    %19 = math.rsqrt %18 : vector<8x1xf32>
    %20 = vector.broadcast %19 : vector<8x1xf32> to vector<8x32xf32>
    %21 = arith.mulf %16, %20 : vector<8x32xf32>
    %22 = vector.broadcast %2 : vector<1x32xf32> to vector<8x32xf32>
    %23 = arith.mulf %21, %22 : vector<8x32xf32>
    %24 = vector.broadcast %3 : vector<1x32xf32> to vector<8x32xf32>
    %25 = arith.addf %23, %24 : vector<8x32xf32>
    %c0_10 = arith.constant 0 : index
    %c0_11 = arith.constant 0 : index
    %26 = vector.load %arg4[%c0_10, %c0_11] : memref<32x96xbf16, #tpu.memory_space<vmem>>, vector<32x96xbf16>
    %c0_12 = arith.constant 0 : index
    %c0_13 = arith.constant 0 : index
    %27 = vector.load %arg5[%c0_12, %c0_13] : memref<32x32xbf16, #tpu.memory_space<vmem>>, vector<32x32xbf16>
    %c0_14 = arith.constant 0 : index
    %c0_15 = arith.constant 0 : index
    %28 = vector.load %arg6[%c0_14, %c0_15] : memref<1x32xf32, #tpu.memory_space<vmem>>, vector<1x32xf32>
    %29 = arith.truncf %25 : vector<8x32xf32> to vector<8x32xbf16>
    %cst_16 = arith.constant dense<0.000000e+00> : vector<8x96xf32>
    %30 = tpu.matmul %29, %26, %cst_16 {dimension_numbers = #tpu.dot_dimension_numbers<[1], [0], [0], [1], [0, 0, 1, 1], [], []>} : vector<8x32xbf16>, vector<32x96xbf16>, vector<8x96xf32> -> vector<8x96xf32>
    %31 = arith.truncf %30 : vector<8x96xf32> to vector<8x96xbf16>
    %32 = vector.extract_strided_slice %31 {offsets = [0, 0], sizes = [8, 32], strides = [1, 1]} : vector<8x96xbf16> to vector<8x32xbf16>
    %33 = vector.extract_strided_slice %31 {offsets = [0, 32], sizes = [8, 32], strides = [1, 1]} : vector<8x96xbf16> to vector<8x32xbf16>
    %34 = vector.extract_strided_slice %31 {offsets = [0, 64], sizes = [8, 32], strides = [1, 1]} : vector<8x96xbf16> to vector<8x32xbf16>
    %35 = vector.extract_strided_slice %32 {offsets = [0, 0], sizes = [8, 8], strides = [1, 1]} : vector<8x32xbf16> to vector<8x8xbf16>
    %36 = vector.extract_strided_slice %32 {offsets = [0, 8], sizes = [8, 8], strides = [1, 1]} : vector<8x32xbf16> to vector<8x8xbf16>
    %37 = vector.extract_strided_slice %32 {offsets = [0, 16], sizes = [8, 8], strides = [1, 1]} : vector<8x32xbf16> to vector<8x8xbf16>
    %38 = vector.extract_strided_slice %32 {offsets = [0, 24], sizes = [8, 8], strides = [1, 1]} : vector<8x32xbf16> to vector<8x8xbf16>
    %39 = vector.shape_cast %35 : vector<8x8xbf16> to vector<1x8x8xbf16>
    %40 = vector.shape_cast %36 : vector<8x8xbf16> to vector<1x8x8xbf16>
    %41 = vector.shape_cast %37 : vector<8x8xbf16> to vector<1x8x8xbf16>
    %42 = vector.shape_cast %38 : vector<8x8xbf16> to vector<1x8x8xbf16>
    %43 = tpu.concatenate %39, %40, %41, %42 in 0 : vector<1x8x8xbf16>, vector<1x8x8xbf16>, vector<1x8x8xbf16>, vector<1x8x8xbf16> -> vector<4x8x8xbf16>
    %44 = vector.extract_strided_slice %33 {offsets = [0, 0], sizes = [8, 8], strides = [1, 1]} : vector<8x32xbf16> to vector<8x8xbf16>
    %45 = vector.extract_strided_slice %33 {offsets = [0, 8], sizes = [8, 8], strides = [1, 1]} : vector<8x32xbf16> to vector<8x8xbf16>
    %46 = vector.extract_strided_slice %33 {offsets = [0, 16], sizes = [8, 8], strides = [1, 1]} : vector<8x32xbf16> to vector<8x8xbf16>
    %47 = vector.extract_strided_slice %33 {offsets = [0, 24], sizes = [8, 8], strides = [1, 1]} : vector<8x32xbf16> to vector<8x8xbf16>
    %48 = vector.shape_cast %44 : vector<8x8xbf16> to vector<1x8x8xbf16>
    %49 = vector.shape_cast %45 : vector<8x8xbf16> to vector<1x8x8xbf16>
    %50 = vector.shape_cast %46 : vector<8x8xbf16> to vector<1x8x8xbf16>
    %51 = vector.shape_cast %47 : vector<8x8xbf16> to vector<1x8x8xbf16>
    %52 = tpu.concatenate %48, %49, %50, %51 in 0 : vector<1x8x8xbf16>, vector<1x8x8xbf16>, vector<1x8x8xbf16>, vector<1x8x8xbf16> -> vector<4x8x8xbf16>
    %53 = vector.extract_strided_slice %34 {offsets = [0, 0], sizes = [8, 8], strides = [1, 1]} : vector<8x32xbf16> to vector<8x8xbf16>
    %54 = vector.extract_strided_slice %34 {offsets = [0, 8], sizes = [8, 8], strides = [1, 1]} : vector<8x32xbf16> to vector<8x8xbf16>
    %55 = vector.extract_strided_slice %34 {offsets = [0, 16], sizes = [8, 8], strides = [1, 1]} : vector<8x32xbf16> to vector<8x8xbf16>
    %56 = vector.extract_strided_slice %34 {offsets = [0, 24], sizes = [8, 8], strides = [1, 1]} : vector<8x32xbf16> to vector<8x8xbf16>
    %57 = vector.shape_cast %53 : vector<8x8xbf16> to vector<1x8x8xbf16>
    %58 = vector.shape_cast %54 : vector<8x8xbf16> to vector<1x8x8xbf16>
    %59 = vector.shape_cast %55 : vector<8x8xbf16> to vector<1x8x8xbf16>
    %60 = vector.shape_cast %56 : vector<8x8xbf16> to vector<1x8x8xbf16>
    %61 = tpu.concatenate %57, %58, %59, %60 in 0 : vector<1x8x8xbf16>, vector<1x8x8xbf16>, vector<1x8x8xbf16>, vector<1x8x8xbf16> -> vector<4x8x8xbf16>
    "tpu.trace_start"() <{level = 10 : i32, message = "hnd,hmd->hnm"}> : () -> ()
    %cst_17 = arith.constant dense<0.000000e+00> : vector<4x8x8xf32>
    %62 = tpu.matmul %43, %52, %cst_17 {dimension_numbers = #tpu.dot_dimension_numbers<[2], [2], [1], [1], [0, 0, 0, 1, 1, 1], [0], [0]>} : vector<4x8x8xbf16>, vector<4x8x8xbf16>, vector<4x8x8xf32> -> vector<4x8x8xf32>
    "tpu.trace_stop"() : () -> ()
    %cst_18 = arith.constant dense<0xFF800000> : vector<4x8xf32>
    %63 = vector.multi_reduction <maximumf>, %62, %cst_18 [2] : vector<4x8x8xf32> to vector<4x8xf32>
    %64 = vector.shape_cast %63 : vector<4x8xf32> to vector<4x8x1xf32>
    %65 = vector.broadcast %64 : vector<4x8x1xf32> to vector<4x8x8xf32>
    %66 = arith.subf %62, %65 : vector<4x8x8xf32>
    %67 = math.exp %66 : vector<4x8x8xf32>
    %cst_19 = arith.constant dense<0.000000e+00> : vector<4x8xf32>
    %68 = vector.multi_reduction <add>, %67, %cst_19 [2] : vector<4x8x8xf32> to vector<4x8xf32>
    %69 = vector.shape_cast %68 : vector<4x8xf32> to vector<4x8x1xf32>
    %70 = tpu.reciprocal %69 {approx = true} : vector<4x8x1xf32> -> vector<4x8x1xf32>
    %71 = vector.broadcast %70 : vector<4x8x1xf32> to vector<4x8x8xf32>
    %72 = arith.mulf %67, %71 : vector<4x8x8xf32>
    %73 = arith.truncf %72 : vector<4x8x8xf32> to vector<4x8x8xbf16>
    "tpu.trace_start"() <{level = 10 : i32, message = "hnm,hmd->hnd"}> : () -> ()
    %cst_20 = arith.constant dense<0.000000e+00> : vector<4x8x8xf32>
    %74 = tpu.matmul %73, %61, %cst_20 {dimension_numbers = #tpu.dot_dimension_numbers<[2], [1], [1], [2], [0, 0, 0, 1, 1, 2], [0], [0]>} : vector<4x8x8xbf16>, vector<4x8x8xbf16>, vector<4x8x8xf32> -> vector<4x8x8xf32>
    "tpu.trace_stop"() : () -> ()
    %75 = vector.extract_strided_slice %74 {offsets = [0, 0, 0], sizes = [1, 8, 8], strides = [1, 1, 1]} : vector<4x8x8xf32> to vector<1x8x8xf32>
    %76 = vector.shape_cast %75 : vector<1x8x8xf32> to vector<8x8xf32>
    %77 = vector.extract_strided_slice %74 {offsets = [1, 0, 0], sizes = [1, 8, 8], strides = [1, 1, 1]} : vector<4x8x8xf32> to vector<1x8x8xf32>
    %78 = vector.shape_cast %77 : vector<1x8x8xf32> to vector<8x8xf32>
    %79 = vector.extract_strided_slice %74 {offsets = [2, 0, 0], sizes = [1, 8, 8], strides = [1, 1, 1]} : vector<4x8x8xf32> to vector<1x8x8xf32>
    %80 = vector.shape_cast %79 : vector<1x8x8xf32> to vector<8x8xf32>
    %81 = vector.extract_strided_slice %74 {offsets = [3, 0, 0], sizes = [1, 8, 8], strides = [1, 1, 1]} : vector<4x8x8xf32> to vector<1x8x8xf32>
    %82 = vector.shape_cast %81 : vector<1x8x8xf32> to vector<8x8xf32>
    %83 = tpu.concatenate %76, %78, %80, %82 in 1 : vector<8x8xf32>, vector<8x8xf32>, vector<8x8xf32>, vector<8x8xf32> -> vector<8x32xf32>
    %84 = arith.truncf %83 : vector<8x32xf32> to vector<8x32xbf16>
    %cst_21 = arith.constant dense<0.000000e+00> : vector<8x32xf32>
    %85 = tpu.matmul %84, %27, %cst_21 {dimension_numbers = #tpu.dot_dimension_numbers<[1], [0], [0], [1], [0, 0, 1, 1], [], []>} : vector<8x32xbf16>, vector<32x32xbf16>, vector<8x32xf32> -> vector<8x32xf32>
    %86 = vector.broadcast %28 : vector<1x32xf32> to vector<8x32xf32>
    %87 = arith.addf %85, %86 : vector<8x32xf32>
    %c0_22 = arith.constant 0 : index
    %c0_23 = arith.constant 0 : index
    %c0_24 = arith.constant 0 : index
    %88 = vector.load %arg7[%c0_22, %c0_23, %c0_24] : memref<1x8x32xf32, #tpu.memory_space<vmem>>, vector<1x8x32xf32>
    %89 = vector.shape_cast %88 : vector<1x8x32xf32> to vector<8x32xf32>
    %90 = vector.shape_cast %87 : vector<8x32xf32> to vector<1x8x32xf32>
    tpu.vector_store %arg7[%c0_22, %c0_23, %c0_24], %90 {strides = array<i32>} : memref<1x8x32xf32, #tpu.memory_space<vmem>>, vector<1x8x32xf32>,
    %c0_25 = arith.constant 0 : index
    %c0_26 = arith.constant 0 : index
    %c0_27 = arith.constant 0 : index
    %91 = vector.load %arg8[%c0_25, %c0_26, %c0_27] : memref<1x8x32xf32, #tpu.memory_space<vmem>>, vector<1x8x32xf32>
    %92 = vector.shape_cast %91 : vector<1x8x32xf32> to vector<8x32xf32>
    %93 = vector.shape_cast %25 : vector<8x32xf32> to vector<1x8x32xf32>
    tpu.vector_store %arg8[%c0_25, %c0_26, %c0_27], %93 {strides = array<i32>} : memref<1x8x32xf32, #tpu.memory_space<vmem>>, vector<1x8x32xf32>,
    return
  }
  func.func @transform_0(%arg0: i32) -> (i32, i32, i32) {
    %c0_i32 = arith.constant 0 : i32
    %c0_i32_0 = arith.constant 0 : i32
    %c0_i32_1 = arith.constant 0 : i32
    return %arg0, %c0_i32, %c0_i32_0 : i32, i32, i32
  }
  func.func @transform_1(%arg0: i32) -> (i32, i32) {
    %c0_i32 = arith.constant 0 : i32
    %c0_i32_0 = arith.constant 0 : i32
    %c0_i32_1 = arith.constant 0 : i32
    return %c0_i32, %c0_i32_0 : i32, i32
  }
  func.func @transform_2(%arg0: i32) -> (i32, i32) {
    %c0_i32 = arith.constant 0 : i32
    %c0_i32_0 = arith.constant 0 : i32
    %c0_i32_1 = arith.constant 0 : i32
    return %c0_i32, %c0_i32_0 : i32, i32
  }
  func.func @transform_3(%arg0: i32) -> (i32, i32) {
    %c0_i32 = arith.constant 0 : i32
    %c0_i32_0 = arith.constant 0 : i32
    %c0_i32_1 = arith.constant 0 : i32
    return %c0_i32, %c0_i32_0 : i32, i32
  }
  func.func @transform_4(%arg0: i32) -> (i32, i32) {
    %c0_i32 = arith.constant 0 : i32
    %c0_i32_0 = arith.constant 0 : i32
    %c0_i32_1 = arith.constant 0 : i32
    return %c0_i32, %c0_i32_0 : i32, i32
  }
  func.func @transform_5(%arg0: i32) -> (i32, i32) {
    %c0_i32 = arith.constant 0 : i32
    %c0_i32_0 = arith.constant 0 : i32
    %c0_i32_1 = arith.constant 0 : i32
    return %c0_i32, %c0_i32_0 : i32, i32
  }
  func.func @transform_6(%arg0: i32) -> (i32, i32, i32) {
    %c0_i32 = arith.constant 0 : i32
    %c0_i32_0 = arith.constant 0 : i32
    %c0_i32_1 = arith.constant 0 : i32
    return %arg0, %c0_i32, %c0_i32_0 : i32, i32, i32
  }
  func.func @transform_7(%arg0: i32) -> (i32, i32, i32) {
    %c0_i32 = arith.constant 0 : i32
    %c0_i32_0 = arith.constant 0 : i32
    %c0_i32_1 = arith.constant 0 : i32
    return %arg0, %c0_i32, %c0_i32_0 : i32, i32, i32
  }
}

</mosaic_0001>

<llo_original>
// kernel: tpu_custom_call.1
$region0: #{tpu_custom_call.1}
  #allocation0 [shape = 'u32[]', space=smem, size = 0x4, offset = 0x4, fixed_abs, tag = 'smem constant byte address 0x4 - core index']
  #allocation1 [shape = 'u32[144,128]{1,0:T(1,128)}', space=vmem, size = 0x12000, scoped, tag = 'internal scratch']
  %s0 = inlined_call_operand.hbm [shape: f32[2,8,32], index: 0, kind: input, shape index: {}]
  %s1 = inlined_call_operand.hbm [shape: f32[1,32], index: 1, kind: input, shape index: {}]
  %s2 = inlined_call_operand.hbm [shape: f32[1,32], index: 2, kind: input, shape index: {}]
  %s3 = inlined_call_operand.hbm [shape: bf16[32,96], index: 3, kind: input, shape index: {}]
  %s4 = inlined_call_operand.hbm [shape: bf16[32,32], index: 4, kind: input, shape index: {}]
  %s5 = inlined_call_operand.hbm [shape: f32[1,32], index: 5, kind: input, shape index: {}]
  %s6 = inlined_call_operand.hbm [shape: f32[2,8,32], index: 6, kind: output, shape index: {0}]
  %s7 = inlined_call_operand.hbm [shape: f32[2,8,32], index: 7, kind: output, shape index: {1}]
  %8 = xla_tuple %s6, %s7
  %s9 = sld [smem:[#allocation0]]
  $region89: #{tpu_custom_call.1} parent=0
    _
  %s11 = ssub.s32 1, %s9
  %s12 = scalar_select 0, %s11, %s9
  $region1: #{tpu_custom_call.1} parent=0
    #allocation2 [shape = 'u8[8192]{0}', space=vmem, size = 0x2000, scoped, tag = 'input window, operand 0']
    #allocation3 [shape = 's32[2]{0}', space=sflag, size = 0x8, scoped, tag = 'scoped memory for tpu_custom_call.1']
    #allocation4 [shape = 's32[2]{0}', space=sflag, size = 0x8, scoped, tag = 'scoped memory for tpu_custom_call.1']
    #allocation5 [shape = 'u8[512]{0}', space=vmem, size = 0x400, scoped, tag = 'input window, operand 1, single buffered']
    #allocation6 [shape = 's32[1]{0}', space=sflag, size = 0x4, scoped, tag = 'scoped memory for tpu_custom_call.1']
    #allocation7 [shape = 'u8[512]{0}', space=vmem, size = 0x400, scoped, tag = 'input window, operand 2, single buffered']
    #allocation8 [shape = 'u8[8192]{0}', space=vmem, size = 0x2000, scoped, tag = 'input window, operand 3, single buffered']
    #allocation9 [shape = 's32[1]{0}', space=sflag, size = 0x4, scoped, tag = 'scoped memory for tpu_custom_call.1']
    #allocation10 [shape = 'u8[8192]{0}', space=vmem, size = 0x2000, scoped, tag = 'input window, operand 4, single buffered']
    #allocation11 [shape = 'u8[512]{0}', space=vmem, size = 0x400, scoped, tag = 'input window, operand 5, single buffered']
    #allocation12 [shape = 's32[1]{0}', space=sflag, size = 0x4, scoped, tag = 'scoped memory for tpu_custom_call.1']
    #allocation13 [shape = 'u8[8192]{0}', space=vmem, size = 0x2000, scoped, tag = 'output window, operand 0']
    #allocation14 [shape = 'u8[8192]{0}', space=vmem, size = 0x2000, scoped, tag = 'output window, operand 1']
    #allocation15 [shape = 's32[2]{0}', space=sflag, size = 0x8, scoped, tag = 'scoped memory for tpu_custom_call.1']
    %13 = vsyncpa [#allocation3], 0
    %s14 = scalar_lea.sflag [#allocation3], 1
    %15 = vsyncpa %s14, 0
    %16 = vsyncpa [#allocation6], 0
    %17 = vsyncpa [#allocation9], 0
    %18 = vsyncpa [#allocation12], 0
    %19 = vsyncpa [#allocation4], 0
    %s20 = scalar_lea.sflag [#allocation4], 1
    %21 = vsyncpa %s20, 0
    %22 = vsyncpa [#allocation15], 0
    %s23 = scalar_lea.sflag [#allocation15], 1
    %24 = vsyncpa %s23, 0
    loop: start=0, step=1, limit=4
    $region2: #{tpu_custom_call.1} parent=1 // loop_pre_header
      _
    $region3: #{tpu_custom_call.1} parent=1 // loop_header
      %s26 = sphi 0, %s30
      %p27 = scmp.ge.s32.totalorder %s26, 4
      %s36 = sphi 0, %s38
      %s39 = sphi 0, %s36
      %s40 = sphi 0, %s39
      %s56 = sphi 0, %s40
      %s60 = sphi 0, %s60
      %s62 = sphi 0, %s60
      %s63 = sphi 0, %s62
      %s77 = sphi 0, %s63
      %s81 = sphi 0, %s81
      %s83 = sphi 0, %s81
      %s84 = sphi 0, %s83
      %s98 = sphi 0, %s84
      %s102 = sphi 0, %s102
      %s104 = sphi 0, %s102
      %s105 = sphi 0, %s104
      %s119 = sphi 0, %s105
      %s123 = sphi 0, %s123
      %s125 = sphi 0, %s123
      %s126 = sphi 0, %s125
      %s140 = sphi 0, %s126
      %s144 = sphi 0, %s144
      %s146 = sphi 0, %s144
      %s147 = sphi 0, %s146
      %s161 = sphi 0, %s147
      %s167 = sphi 0, %s169
      %s170 = sphi 0, %s167
      %s171 = sphi 0, %s170
      %s187 = sphi 0, %s171
      %s193 = sphi 0, %s195
      %s196 = sphi 0, %s193
      %s197 = sphi 0, %s196
      %s213 = sphi 0, %s197
    $region4: #{tpu_custom_call.1} parent=1 // loop_header_branch
      %29 = sbr.rel (%p27) target = $region8
    $region5: #{tpu_custom_call.1} parent=1 // loop_body
      %s31 = ssub.s32 %s26, 1
      %s32 = ssub.s32 %s26, 2
      %s33 = sadd.s32 %s26, 1
      %s34 = ssub.s32 %s26, %s33
      %p35 = scmp.eq.s32.totalorder %s34, 0
      %s37 = sadd.s32 %s36, 1
      %s38 = scalar_select %p35, %s36, %s37
      %p41 = pneg %p35
      %p42 = scmp.eq.s32.totalorder %s26, 1
      %p43 = por %p41, %p42
      %p44 = scmp.ne.s32.totalorder %s36, %s39
      %p45 = scmp.eq.s32.totalorder %s26, 0
      %p46 = por %p44, %p45
      %p47 = scmp.ne.s32.totalorder %s36, %s39
      %p48 = scmp.eq.s32.totalorder %s31, 1
      %p49 = por %p47, %p48
      %p50 = scmp.ne.s32.totalorder %s39, %s40
      %p51 = scmp.eq.s32.totalorder %s31, 0
      %p52 = por %p50, %p51
      %p53 = scmp.ne.s32.totalorder %s39, %s40
      %p54 = scmp.eq.s32.totalorder %s32, 1
      %p55 = por %p53, %p54
      %p57 = scmp.ne.s32.totalorder %s40, %s56
      %p58 = scmp.eq.s32.totalorder %s32, 0
      %p59 = por %p57, %p58
      %s61 = sadd.s32 %s60, 1
      %p64 = scmp.eq.s32.totalorder %s26, 1
      %p65 = scmp.ne.s32.totalorder %s60, %s62
      %p66 = scmp.eq.s32.totalorder %s26, 0
      %p67 = por %p65, %p66
      %p68 = scmp.ne.s32.totalorder %s60, %s62
      %p69 = scmp.eq.s32.totalorder %s31, 1
      %p70 = por %p68, %p69
      %p71 = scmp.ne.s32.totalorder %s62, %s63
      %p72 = scmp.eq.s32.totalorder %s31, 0
      %p73 = por %p71, %p72
      %p74 = scmp.ne.s32.totalorder %s62, %s63
      %p75 = scmp.eq.s32.totalorder %s32, 1
      %p76 = por %p74, %p75
      %p78 = scmp.ne.s32.totalorder %s63, %s77
      %p79 = scmp.eq.s32.totalorder %s32, 0
      %p80 = por %p78, %p79
      %s82 = sadd.s32 %s81, 1
      %p85 = scmp.eq.s32.totalorder %s26, 1
      %p86 = scmp.ne.s32.totalorder %s81, %s83
      %p87 = scmp.eq.s32.totalorder %s26, 0
      %p88 = por %p86, %p87
      %p89 = scmp.ne.s32.totalorder %s81, %s83
      %p90 = scmp.eq.s32.totalorder %s31, 1
      %p91 = por %p89, %p90
      %p92 = scmp.ne.s32.totalorder %s83, %s84
      %p93 = scmp.eq.s32.totalorder %s31, 0
      %p94 = por %p92, %p93
      %p95 = scmp.ne.s32.totalorder %s83, %s84
      %p96 = scmp.eq.s32.totalorder %s32, 1
      %p97 = por %p95, %p96
      %p99 = scmp.ne.s32.totalorder %s84, %s98
      %p100 = scmp.eq.s32.totalorder %s32, 0
      %p101 = por %p99, %p100
      %s103 = sadd.s32 %s102, 1
      %p106 = scmp.eq.s32.totalorder %s26, 1
      %p107 = scmp.ne.s32.totalorder %s102, %s104
      %p108 = scmp.eq.s32.totalorder %s26, 0
      %p109 = por %p107, %p108
      %p110 = scmp.ne.s32.totalorder %s102, %s104
      %p111 = scmp.eq.s32.totalorder %s31, 1
      %p112 = por %p110, %p111
      %p113 = scmp.ne.s32.totalorder %s104, %s105
      %p114 = scmp.eq.s32.totalorder %s31, 0
      %p115 = por %p113, %p114
      %p116 = scmp.ne.s32.totalorder %s104, %s105
      %p117 = scmp.eq.s32.totalorder %s32, 1
      %p118 = por %p116, %p117
      %p120 = scmp.ne.s32.totalorder %s105, %s119
      %p121 = scmp.eq.s32.totalorder %s32, 0
      %p122 = por %p120, %p121
      %s124 = sadd.s32 %s123, 1
      %p127 = scmp.eq.s32.totalorder %s26, 1
      %p128 = scmp.ne.s32.totalorder %s123, %s125
      %p129 = scmp.eq.s32.totalorder %s26, 0
      %p130 = por %p128, %p129
      %p131 = scmp.ne.s32.totalorder %s123, %s125
      %p132 = scmp.eq.s32.totalorder %s31, 1
      %p133 = por %p131, %p132
      %p134 = scmp.ne.s32.totalorder %s125, %s126
      %p135 = scmp.eq.s32.totalorder %s31, 0
      %p136 = por %p134, %p135
      %p137 = scmp.ne.s32.totalorder %s125, %s126
      %p138 = scmp.eq.s32.totalorder %s32, 1
      %p139 = por %p137, %p138
      %p141 = scmp.ne.s32.totalorder %s126, %s140
      %p142 = scmp.eq.s32.totalorder %s32, 0
      %p143 = por %p141, %p142
      %s145 = sadd.s32 %s144, 1
      %p148 = scmp.eq.s32.totalorder %s26, 1
      %p149 = scmp.ne.s32.totalorder %s144, %s146
      %p150 = scmp.eq.s32.totalorder %s26, 0
      %p151 = por %p149, %p150
      %p152 = scmp.ne.s32.totalorder %s144, %s146
      %p153 = scmp.eq.s32.totalorder %s31, 1
      %p154 = por %p152, %p153
      %p155 = scmp.ne.s32.totalorder %s146, %s147
      %p156 = scmp.eq.s32.totalorder %s31, 0
      %p157 = por %p155, %p156
      %p158 = scmp.ne.s32.totalorder %s146, %s147
      %p159 = scmp.eq.s32.totalorder %s32, 1
      %p160 = por %p158, %p159
      %p162 = scmp.ne.s32.totalorder %s147, %s161
      %p163 = scmp.eq.s32.totalorder %s32, 0
      %p164 = por %p162, %p163
      %s165 = ssub.s32 %s26, %s33
      %p166 = scmp.eq.s32.totalorder %s165, 0
      %s168 = sadd.s32 %s167, 1
      %s169 = scalar_select %p166, %s167, %s168
      %p172 = pneg %p166
      %p173 = scmp.eq.s32.totalorder %s26, 1
      %p174 = por %p172, %p173
      %p175 = scmp.ne.s32.totalorder %s167, %s170
      %p176 = scmp.eq.s32.totalorder %s26, 0
      %p177 = por %p175, %p176
      %p178 = scmp.ne.s32.totalorder %s167, %s170
      %p179 = scmp.eq.s32.totalorder %s31, 1
      %p180 = por %p178, %p179
      %p181 = scmp.ne.s32.totalorder %s170, %s171
      %p182 = scmp.eq.s32.totalorder %s31, 0
      %p183 = por %p181, %p182
      %p184 = scmp.ne.s32.totalorder %s170, %s171
      %p185 = scmp.eq.s32.totalorder %s32, 1
      %p186 = por %p184, %p185
      %p188 = scmp.ne.s32.totalorder %s171, %s187
      %p189 = scmp.eq.s32.totalorder %s32, 0
      %p190 = por %p188, %p189
      %s191 = ssub.s32 %s26, %s33
      %p192 = scmp.eq.s32.totalorder %s191, 0
      %s194 = sadd.s32 %s193, 1
      %s195 = scalar_select %p192, %s193, %s194
      %p198 = pneg %p192
      %p199 = scmp.eq.s32.totalorder %s26, 1
      %p200 = por %p198, %p199
      %p201 = scmp.ne.s32.totalorder %s193, %s196
      %p202 = scmp.eq.s32.totalorder %s26, 0
      %p203 = por %p201, %p202
      %p204 = scmp.ne.s32.totalorder %s193, %s196
      %p205 = scmp.eq.s32.totalorder %s31, 1
      %p206 = por %p204, %p205
      %p207 = scmp.ne.s32.totalorder %s196, %s197
      %p208 = scmp.eq.s32.totalorder %s31, 0
      %p209 = por %p207, %p208
      %p210 = scmp.ne.s32.totalorder %s196, %s197
      %p211 = scmp.eq.s32.totalorder %s32, 1
      %p212 = por %p210, %p211
      %p214 = scmp.ne.s32.totalorder %s197, %s213
      %p215 = scmp.eq.s32.totalorder %s32, 0
      %p216 = por %p214, %p215
      %p217 = scmp.le.s32.totalorder 1, %s26
      %p218 = scmp.lt.s32.totalorder %s26, 3
      %p219 = pnand %p217, %p218
      %p220 = pneg %p219
      // Predicated region
      $region9: #{tpu_custom_call.1} parent=5 // pred_check
        _
      $region10: #{tpu_custom_call.1} parent=5 // pred_check_branch
        %222 = sbr.rel (%p219) target = $region12
      $region11: #{tpu_custom_call.1} parent=5 // pred_region
        %s223 = ssub.s32 %s26, 1
        // Predicated region
        $region13: #{tpu_custom_call.1} parent=11 // pred_check
          %p224 = pneg %p73
        $region14: #{tpu_custom_call.1} parent=11 // pred_check_branch
          %226 = sbr.rel (%p224) target = $region16
        $region15: #{tpu_custom_call.1} parent=11 // pred_region
          %s228 = ssub.s32 16, 16
          %229 = vsyncadd [#allocation6], %s228
          %s231 = sshll.u32 [#allocation5], 4
          %s232 = int_to_ptr.vmem [resolvable:$true] %s231
          %234 = dma.hbm_to_vmem [thread:$0]  %s1, 16, %s232, [#allocation6]
        $region16: #{tpu_custom_call.1} parent=11 // pred_fallthru
          _
        // Predicated region
        $region17: #{tpu_custom_call.1} parent=11 // pred_check
          %p235 = pneg %p94
        $region18: #{tpu_custom_call.1} parent=11 // pred_check_branch
          %237 = sbr.rel (%p235) target = $region20
        $region19: #{tpu_custom_call.1} parent=11 // pred_region
          %s239 = ssub.s32 16, 16
          %240 = vsyncadd [#allocation6], %s239
          %s242 = sshll.u32 [#allocation7], 4
          %s243 = int_to_ptr.vmem [resolvable:$true] %s242
          %245 = dma.hbm_to_vmem [thread:$0]  %s2, 16, %s243, [#allocation6]
        $region20: #{tpu_custom_call.1} parent=11 // pred_fallthru
          _
        // Predicated region
        $region21: #{tpu_custom_call.1} parent=11 // pred_check
          %p246 = pneg %p115
        $region22: #{tpu_custom_call.1} parent=11 // pred_check_branch
          %248 = sbr.rel (%p246) target = $region24
        $region23: #{tpu_custom_call.1} parent=11 // pred_region
          %s250 = ssub.s32 256, 256
          %251 = vsyncadd [#allocation9], %s250
          %s252 = sshll.u32 [#allocation8], 4
          %s253 = int_to_ptr.vmem [resolvable:$true] %s252
          %258 = dma.hbm_to_vmem [thread:$0]  %s3, 256, %s253, [#allocation9], 64, 64, 4
        $region24: #{tpu_custom_call.1} parent=11 // pred_fallthru
          _
        // Predicated region
        $region25: #{tpu_custom_call.1} parent=11 // pred_check
          %p259 = pneg %p136
        $region26: #{tpu_custom_call.1} parent=11 // pred_check_branch
          %261 = sbr.rel (%p259) target = $region28
        $region27: #{tpu_custom_call.1} parent=11 // pred_region
          %s263 = ssub.s32 256, 256
          %264 = vsyncadd [#allocation9], %s263
          %s265 = sshll.u32 [#allocation10], 4
          %s266 = int_to_ptr.vmem [resolvable:$true] %s265
          %271 = dma.hbm_to_vmem [thread:$0]  %s4, 256, %s266, [#allocation9], 64, 64, 4
        $region28: #{tpu_custom_call.1} parent=11 // pred_fallthru
          _
        // Predicated region
        $region29: #{tpu_custom_call.1} parent=11 // pred_check
          %p272 = pneg %p157
        $region30: #{tpu_custom_call.1} parent=11 // pred_check_branch
          %274 = sbr.rel (%p272) target = $region32
        $region31: #{tpu_custom_call.1} parent=11 // pred_region
          %s276 = ssub.s32 16, 16
          %277 = vsyncadd [#allocation12], %s276
          %s279 = sshll.u32 [#allocation11], 4
          %s280 = int_to_ptr.vmem [resolvable:$true] %s279
          %282 = dma.hbm_to_vmem [thread:$0]  %s5, 16, %s280, [#allocation12]
        $region32: #{tpu_custom_call.1} parent=11 // pred_fallthru
          _
      $region12: #{tpu_custom_call.1} parent=5 // pred_fallthru
        _
      %p283 = scmp.lt.s32.totalorder %s26, 2
      // Predicated region
      $region33: #{tpu_custom_call.1} parent=5 // pred_check
        %p284 = pneg %p283
      $region34: #{tpu_custom_call.1} parent=5 // pred_check_branch
        %286 = sbr.rel (%p284) target = $region36
      $region35: #{tpu_custom_call.1} parent=5 // pred_region
        // Predicated region
        $region37: #{tpu_custom_call.1} parent=35 // pred_check
          %p287 = pneg %p46
        $region38: #{tpu_custom_call.1} parent=35 // pred_check_branch
          %289 = sbr.rel (%p287) target = $region40
        $region39: #{tpu_custom_call.1} parent=35 // pred_region
          %s290 = sand.u32 %s36, 1
          %s291 = scalar_lea.sflag [#allocation3], %s290
          %s292 = sand.u32 %s36, 1
          %s293 = smul.addr %s292, 8
          %s294 = scalar_lea.vmem [#allocation2], %s293
          %s296 = ssub.s32 128, 128
          %297 = vsyncadd %s291, %s296
          %s298 = smul.addr %s26, 128
          %s299 = scalar_lea.hbm %s0, %s298
          %s301 = sshll.u32 %s294, 4
          %s302 = int_to_ptr.vmem [resolvable:$true] %s301
          %304 = dma.hbm_to_vmem [thread:$0]  %s299, 128, %s302, %s291
        $region40: #{tpu_custom_call.1} parent=35 // pred_fallthru
          _
      $region36: #{tpu_custom_call.1} parent=5 // pred_fallthru
        _
      %p305 = scmp.le.s32.totalorder 1, %s26
      %p306 = scmp.lt.s32.totalorder %s26, 3
      %p307 = pnand %p305, %p306
      %p308 = pneg %p307
      // Predicated region
      $region41: #{tpu_custom_call.1} parent=5 // pred_check
        _
      $region42: #{tpu_custom_call.1} parent=5 // pred_check_branch
        %310 = sbr.rel (%p307) target = $region44
      $region43: #{tpu_custom_call.1} parent=5 // pred_region
        %s311 = ssub.s32 %s26, 1
        %s312 = sand.u32 %s39, 1
        %s313 = scalar_lea.sflag [#allocation3], %s312
        %s314 = sand.u32 %s39, 1
        %s315 = smul.addr %s314, 8
        %s316 = scalar_lea.vmem [#allocation2], %s315
        // Predicated region
        $region45: #{tpu_custom_call.1} parent=43 // pred_check
          %p317 = pneg %p52
        $region46: #{tpu_custom_call.1} parent=43 // pred_check_branch
          %319 = sbr.rel (%p317) target = $region48
        $region47: #{tpu_custom_call.1} parent=43 // pred_region
          %320 = dma.done %s313, 128
        $region48: #{tpu_custom_call.1} parent=43 // pred_fallthru
          _
        // Predicated region
        $region49: #{tpu_custom_call.1} parent=43 // pred_check
          %p321 = pneg %p73
        $region50: #{tpu_custom_call.1} parent=43 // pred_check_branch
          %323 = sbr.rel (%p321) target = $region52
        $region51: #{tpu_custom_call.1} parent=43 // pred_region
          %324 = dma.done [#allocation6], 16
        $region52: #{tpu_custom_call.1} parent=43 // pred_fallthru
          _
        // Predicated region
        $region53: #{tpu_custom_call.1} parent=43 // pred_check
          %p325 = pneg %p94
        $region54: #{tpu_custom_call.1} parent=43 // pred_check_branch
          %327 = sbr.rel (%p325) target = $region56
        $region55: #{tpu_custom_call.1} parent=43 // pred_region
          %328 = dma.done [#allocation6], 16
        $region56: #{tpu_custom_call.1} parent=43 // pred_fallthru
          _
        // Predicated region
        $region57: #{tpu_custom_call.1} parent=43 // pred_check
          %p329 = pneg %p115
        $region58: #{tpu_custom_call.1} parent=43 // pred_check_branch
          %331 = sbr.rel (%p329) target = $region60
        $region59: #{tpu_custom_call.1} parent=43 // pred_region
          %332 = dma.done [#allocation9], 256
        $region60: #{tpu_custom_call.1} parent=43 // pred_fallthru
          _
        // Predicated region
        $region61: #{tpu_custom_call.1} parent=43 // pred_check
          %p333 = pneg %p136
        $region62: #{tpu_custom_call.1} parent=43 // pred_check_branch
          %335 = sbr.rel (%p333) target = $region64
        $region63: #{tpu_custom_call.1} parent=43 // pred_region
          %336 = dma.done [#allocation9], 256
        $region64: #{tpu_custom_call.1} parent=43 // pred_fallthru
          _
        // Predicated region
        $region65: #{tpu_custom_call.1} parent=43 // pred_check
          %p337 = pneg %p157
        $region66: #{tpu_custom_call.1} parent=43 // pred_check_branch
          %339 = sbr.rel (%p337) target = $region68
        $region67: #{tpu_custom_call.1} parent=43 // pred_region
          %340 = dma.done [#allocation12], 16
        $region68: #{tpu_custom_call.1} parent=43 // pred_fallthru
          _
        %s341 = sand.u32 %s39, 1
        %s342 = scalar_lea.sflag [#allocation3], %s341
        %s343 = sand.u32 %s39, 1
        %s344 = smul.addr %s343, 8
        %s345 = scalar_lea.vmem [#allocation2], %s344
        %p346 = pneg %p52
        %p347 = pneg %p49
        %p348 = pneg %p73
        %p349 = pneg %p70
        %p350 = pneg %p94
        %p351 = pneg %p91
        %p352 = pneg %p115
        %p353 = pneg %p112
        %p354 = pneg %p136
        %p355 = pneg %p133
        %p356 = pneg %p157
        %p357 = pneg %p154
        %p358 = pneg %p183
        %p359 = pneg %p180
        %s360 = sand.u32 %s170, 1
        %s361 = scalar_lea.sflag [#allocation4], %s360
        %s362 = sand.u32 %s170, 1
        %s363 = smul.addr %s362, 8
        %s364 = scalar_lea.vmem [#allocation13], %s363
        %p365 = pneg %p209
        %p366 = pneg %p206
        %s367 = sand.u32 %s196, 1
        %s368 = scalar_lea.sflag [#allocation15], %s367
        %s369 = sand.u32 %s196, 1
        %s370 = smul.addr %s369, 8
        %s371 = scalar_lea.vmem [#allocation14], %s370
        %v373 = vld [vmem:[%s316] sm:$0xff]
        %v374 = vld [vmem:[#allocation5] sm:$0x1]
        %v375 = vld [vmem:[#allocation7] sm:$0x1]
        %vm376 = vcmask 261120
        %v377 = vsel %vm376, %v373, 0.0
        %378 = vadd.xlane.f32.xlu0 %v377
        %v379 = vpop.xlane.xlu0 %378
        %v380 = vrcp.pop 32.0
        %v381 = vmul.f32 %v379, %v380
        %v382 = vsub.f32 %v373, %v381
        %v383 = vmul.f32 %v382, %v382
        %v384 = vsel %vm376, %v383, 0.0
        %385 = vadd.xlane.f32.xlu0 %v384
        %v386 = vpop.xlane.xlu0 %385
        %v387 = vmul.f32 %v386, %v380
        %v388 = vadd.f32 %v387, 1e-05
        %v389 = vrsqrt.pop %v388
        %v390 = vmul.f32 %v382, %v389
        %v392 = vlaneseq
        %v393 = vshrl.u32 %v392, 7
        %v394 = vsub.s32 0, %v393
        %v395 = vrot.slane %v374, %v394
        %v397 = vmul.f32 %v390, %v395
        %v399 = vlaneseq
        %v400 = vshrl.u32 %v399, 7
        %v401 = vsub.s32 0, %v400
        %v402 = vrot.slane %v375, %v401
        %v404 = vadd.f32 %v397, %v402
        %v405 = vld [vmem:[#allocation8] sm:$0xf]
        %v406 = vld [vmem:[#allocation8 + $0x4] sm:$0xf]
        %v407 = vld [vmem:[#allocation8 + $0x8] sm:$0xf]
        %v408 = vld [vmem:[#allocation8 + $0xc] sm:$0xf]
        %v409 = vld [vmem:[#allocation10] sm:$0xf]
        %v410 = vld [vmem:[#allocation10 + $0x4] sm:$0xf]
        %v411 = vld [vmem:[#allocation10 + $0x8] sm:$0xf]
        %v412 = vld [vmem:[#allocation10 + $0xc] sm:$0xf]
        %v413 = vld [vmem:[#allocation11] sm:$0x1]
        %v414 = vpack.c.bf16 %v404, %v404
        %v419 = vunpack.c.l.b16 %v405
        %v420 = vunpack.c.l.b16 %v406
        %v421 = vunpack.c.l.b16 %v407
        %v422 = vunpack.c.l.b16 %v408
        %v423 = vpack.c.b16 %v420, %v419
        %v424 = vpack.c.b16 %v422, %v421
        %v428 = vsel %vm376, %v414, 0
        %430 = vmatprep.subr.bf16.mxu0 0
        %431 = vmatpush1.bf16.msra.mxu0 %v423
        %432 = vmatprep.subr.bf16.mxu0 0
        %433 = vmatpush1.bf16.msra.mxu0 %v424
        %434 = vmatprep.subr.bf16.mxu0 0
        %435 = vmatpush1.bf16.msra.mxu0 0
        %436 = vmatprep.subr.bf16.mxu0 0
        %437 = vmatpush1.bf16.msra.mxu0 0
        %438 = vmatprep.subr.bf16.mxu0 0
        %439 = vmatpush1.bf16.msra.mxu0 0
        %440 = vmatprep.subr.bf16.mxu0 0
        %441 = vmatpush1.bf16.msra.mxu0 0
        %442 = vmatprep.subr.bf16.mxu0 0
        %443 = vmatpush1.bf16.msra.mxu0 0
        %444 = vmatprep.subr.bf16.mxu0 0
        %445 = vmatpush1.bf16.msra.mxu0 0
        %446 = vmatprep.subr.bf16.mxu0 0
        %447 = vmatpush1.bf16.msra.mxu0 0
        %448 = vmatprep.subr.bf16.mxu0 0
        %449 = vmatpush1.bf16.msra.mxu0 0
        %450 = vmatprep.subr.bf16.mxu0 0
        %451 = vmatpush1.bf16.msra.mxu0 0
        %452 = vmatprep.subr.bf16.mxu0 0
        %453 = vmatpush1.bf16.msra.mxu0 0
        %454 = vmatprep.subr.bf16.mxu0 0
        %455 = vmatpush1.bf16.msra.mxu0 0
        %456 = vmatprep.subr.bf16.mxu0 0
        %457 = vmatpush1.bf16.msra.mxu0 0
        %458 = vmatprep.subr.bf16.mxu0 0
        %459 = vmatpush1.bf16.msra.mxu0 0
        %460 = vmatprep.subr.bf16.mxu0 0
        %461 = vmatpush1.bf16.msra.mxu0 0
        %462 = vmatprep.mubr.bf16.mxu0 0
        %463 = vmatmul.mubr.bf16.gmra.mrb[0].mxu0 %v428
        %v464 = vpop.f32.mrb[0].mxu0
        %v465 = vadd.f32 0.0, %v464
        %v466 = vpop.f32.mrb[0].mxu0
        %v467 = vpop.f32.mrb[0].mxu0
        %v468 = vpop.f32.mrb[0].mxu0
        %469 = vdwg.mxu0
        %v470 = vpack.c.bf16 %v465, %v465
        %472 = vrot.lane.b32.xlu0 %v470, 120
        %v473 = vpop.permute.xlu0 %472
        %474 = vrot.lane.b32.xlu0 %v470, 112
        %v475 = vpop.permute.xlu0 %474
        %476 = vrot.lane.b32.xlu0 %v470, 104
        %v477 = vpop.permute.xlu0 %476
        %478 = vrot.lane.b32.xlu0 %v470, 96
        %v479 = vpop.permute.xlu0 %478
        %vm480 = vcmask 64512
        %v482 = vsel %vm480, %v470, 0
        %v485 = vsel %vm480, %v479, 0
        %487 = vmatprep.subr.bf16.mxu0 0
        %488 = vmatpush1.bf16.xpose.msra.mxu0 %v485
        %489 = vmatprep.subr.bf16.mxu0 0
        %490 = vmatpush1.bf16.xpose.msra.mxu0 0
        %491 = vmatprep.subr.bf16.mxu0 0
        %492 = vmatpush1.bf16.xpose.msra.mxu0 0
        %493 = vmatprep.subr.bf16.mxu0 0
        %494 = vmatpush1.bf16.xpose.msra.mxu0 0
        %495 = vmatprep.subr.bf16.mxu0 0
        %496 = vmatpush1.bf16.xpose.msra.mxu0 0
        %497 = vmatprep.subr.bf16.mxu0 0
        %498 = vmatpush1.bf16.xpose.msra.mxu0 0
        %499 = vmatprep.subr.bf16.mxu0 0
        %500 = vmatpush1.bf16.xpose.msra.mxu0 0
        %501 = vmatprep.subr.bf16.mxu0 0
        %502 = vmatpush1.bf16.xpose.msra.mxu0 0
        %503 = vmatprep.subr.bf16.mxu0 0
        %504 = vmatpush1.bf16.xpose.msra.mxu0 0
        %505 = vmatprep.subr.bf16.mxu0 0
        %506 = vmatpush1.bf16.xpose.msra.mxu0 0
        %507 = vmatprep.subr.bf16.mxu0 0
        %508 = vmatpush1.bf16.xpose.msra.mxu0 0
        %509 = vmatprep.subr.bf16.mxu0 0
        %510 = vmatpush1.bf16.xpose.msra.mxu0 0
        %511 = vmatprep.subr.bf16.mxu0 0
        %512 = vmatpush1.bf16.xpose.msra.mxu0 0
        %513 = vmatprep.subr.bf16.mxu0 0
        %514 = vmatpush1.bf16.xpose.msra.mxu0 0
        %515 = vmatprep.subr.bf16.mxu0 0
        %516 = vmatpush1.bf16.xpose.msra.mxu0 0
        %517 = vmatprep.subr.bf16.mxu0 0
        %518 = vmatpush1.bf16.xpose.msra.mxu0 0
        %519 = vmatprep.mubr.bf16.mxu0 0
        %520 = vmatmul.mubr.bf16.gmra.mrb[0].mxu0 %v482
        %v521 = vpop.f32.mrb[0].mxu0
        %v522 = vadd.f32 0.0, %v521
        %v523 = vpop.f32.mrb[0].mxu0
        %v524 = vpop.f32.mrb[0].mxu0
        %v525 = vpop.f32.mrb[0].mxu0
        %526 = vdwg.mxu0
        %527 = vrot.lane.b32.xlu0 %v473, 96
        %v528 = vpop.permute.xlu0 %527
        %v530 = vsel %vm480, %v473, 0
        %v533 = vsel %vm480, %v528, 0
        %535 = vmatprep.subr.bf16.mxu0 0
        %536 = vmatpush1.bf16.xpose.msra.mxu0 %v533
        %537 = vmatprep.subr.bf16.mxu0 0
        %538 = vmatpush1.bf16.xpose.msra.mxu0 0
        %539 = vmatprep.subr.bf16.mxu0 0
        %540 = vmatpush1.bf16.xpose.msra.mxu0 0
        %541 = vmatprep.subr.bf16.mxu0 0
        %542 = vmatpush1.bf16.xpose.msra.mxu0 0
        %543 = vmatprep.subr.bf16.mxu0 0
        %544 = vmatpush1.bf16.xpose.msra.mxu0 0
        %545 = vmatprep.subr.bf16.mxu0 0
        %546 = vmatpush1.bf16.xpose.msra.mxu0 0
        %547 = vmatprep.subr.bf16.mxu0 0
        %548 = vmatpush1.bf16.xpose.msra.mxu0 0
        %549 = vmatprep.subr.bf16.mxu0 0
        %550 = vmatpush1.bf16.xpose.msra.mxu0 0
        %551 = vmatprep.subr.bf16.mxu0 0
        %552 = vmatpush1.bf16.xpose.msra.mxu0 0
        %553 = vmatprep.subr.bf16.mxu0 0
        %554 = vmatpush1.bf16.xpose.msra.mxu0 0
        %555 = vmatprep.subr.bf16.mxu0 0
        %556 = vmatpush1.bf16.xpose.msra.mxu0 0
        %557 = vmatprep.subr.bf16.mxu0 0
        %558 = vmatpush1.bf16.xpose.msra.mxu0 0
        %559 = vmatprep.subr.bf16.mxu0 0
        %560 = vmatpush1.bf16.xpose.msra.mxu0 0
        %561 = vmatprep.subr.bf16.mxu0 0
        %562 = vmatpush1.bf16.xpose.msra.mxu0 0
        %563 = vmatprep.subr.bf16.mxu0 0
        %564 = vmatpush1.bf16.xpose.msra.mxu0 0
        %565 = vmatprep.subr.bf16.mxu0 0
        %566 = vmatpush1.bf16.xpose.msra.mxu0 0
        %567 = vmatprep.mubr.bf16.mxu0 0
        %568 = vmatmul.mubr.bf16.gmra.mrb[0].mxu0 %v530
        %v569 = vpop.f32.mrb[0].mxu0
        %v570 = vadd.f32 0.0, %v569
        %v571 = vpop.f32.mrb[0].mxu0
        %v572 = vpop.f32.mrb[0].mxu0
        %v573 = vpop.f32.mrb[0].mxu0
        %574 = vdwg.mxu0
        %575 = vrot.lane.b32.xlu0 %v475, 96
        %v576 = vpop.permute.xlu0 %575
        %v578 = vsel %vm480, %v475, 0
        %v581 = vsel %vm480, %v576, 0
        %583 = vmatprep.subr.bf16.mxu0 0
        %584 = vmatpush1.bf16.xpose.msra.mxu0 %v581
        %585 = vmatprep.subr.bf16.mxu0 0
        %586 = vmatpush1.bf16.xpose.msra.mxu0 0
        %587 = vmatprep.subr.bf16.mxu0 0
        %588 = vmatpush1.bf16.xpose.msra.mxu0 0
        %589 = vmatprep.subr.bf16.mxu0 0
        %590 = vmatpush1.bf16.xpose.msra.mxu0 0
        %591 = vmatprep.subr.bf16.mxu0 0
        %592 = vmatpush1.bf16.xpose.msra.mxu0 0
        %593 = vmatprep.subr.bf16.mxu0 0
        %594 = vmatpush1.bf16.xpose.msra.mxu0 0
        %595 = vmatprep.subr.bf16.mxu0 0
        %596 = vmatpush1.bf16.xpose.msra.mxu0 0
        %597 = vmatprep.subr.bf16.mxu0 0
        %598 = vmatpush1.bf16.xpose.msra.mxu0 0
        %599 = vmatprep.subr.bf16.mxu0 0
        %600 = vmatpush1.bf16.xpose.msra.mxu0 0
        %601 = vmatprep.subr.bf16.mxu0 0
        %602 = vmatpush1.bf16.xpose.msra.mxu0 0
        %603 = vmatprep.subr.bf16.mxu0 0
        %604 = vmatpush1.bf16.xpose.msra.mxu0 0
        %605 = vmatprep.subr.bf16.mxu0 0
        %606 = vmatpush1.bf16.xpose.msra.mxu0 0
        %607 = vmatprep.subr.bf16.mxu0 0
        %608 = vmatpush1.bf16.xpose.msra.mxu0 0
        %609 = vmatprep.subr.bf16.mxu0 0
        %610 = vmatpush1.bf16.xpose.msra.mxu0 0
        %611 = vmatprep.subr.bf16.mxu0 0
        %612 = vmatpush1.bf16.xpose.msra.mxu0 0
        %613 = vmatprep.subr.bf16.mxu0 0
        %614 = vmatpush1.bf16.xpose.msra.mxu0 0
        %615 = vmatprep.mubr.bf16.mxu0 0
        %616 = vmatmul.mubr.bf16.gmra.mrb[0].mxu0 %v578
        %v617 = vpop.f32.mrb[0].mxu0
        %v618 = vadd.f32 0.0, %v617
        %v619 = vpop.f32.mrb[0].mxu0
        %v620 = vpop.f32.mrb[0].mxu0
        %v621 = vpop.f32.mrb[0].mxu0
        %622 = vdwg.mxu0
        %623 = vrot.lane.b32.xlu0 %v477, 96
        %v624 = vpop.permute.xlu0 %623
        %v626 = vsel %vm480, %v477, 0
        %v629 = vsel %vm480, %v624, 0
        %631 = vmatprep.subr.bf16.mxu0 0
        %632 = vmatpush1.bf16.xpose.msra.mxu0 %v629
        %633 = vmatprep.subr.bf16.mxu0 0
        %634 = vmatpush1.bf16.xpose.msra.mxu0 0
        %635 = vmatprep.subr.bf16.mxu0 0
        %636 = vmatpush1.bf16.xpose.msra.mxu0 0
        %637 = vmatprep.subr.bf16.mxu0 0
        %638 = vmatpush1.bf16.xpose.msra.mxu0 0
        %639 = vmatprep.subr.bf16.mxu0 0
        %640 = vmatpush1.bf16.xpose.msra.mxu0 0
        %641 = vmatprep.subr.bf16.mxu0 0
        %642 = vmatpush1.bf16.xpose.msra.mxu0 0
        %643 = vmatprep.subr.bf16.mxu0 0
        %644 = vmatpush1.bf16.xpose.msra.mxu0 0
        %645 = vmatprep.subr.bf16.mxu0 0
        %646 = vmatpush1.bf16.xpose.msra.mxu0 0
        %647 = vmatprep.subr.bf16.mxu0 0
        %648 = vmatpush1.bf16.xpose.msra.mxu0 0
        %649 = vmatprep.subr.bf16.mxu0 0
        %650 = vmatpush1.bf16.xpose.msra.mxu0 0
        %651 = vmatprep.subr.bf16.mxu0 0
        %652 = vmatpush1.bf16.xpose.msra.mxu0 0
        %653 = vmatprep.subr.bf16.mxu0 0
        %654 = vmatpush1.bf16.xpose.msra.mxu0 0
        %655 = vmatprep.subr.bf16.mxu0 0
        %656 = vmatpush1.bf16.xpose.msra.mxu0 0
        %657 = vmatprep.subr.bf16.mxu0 0
        %658 = vmatpush1.bf16.xpose.msra.mxu0 0
        %659 = vmatprep.subr.bf16.mxu0 0
        %660 = vmatpush1.bf16.xpose.msra.mxu0 0
        %661 = vmatprep.subr.bf16.mxu0 0
        %662 = vmatpush1.bf16.xpose.msra.mxu0 0
        %663 = vmatprep.mubr.bf16.mxu0 0
        %664 = vmatmul.mubr.bf16.gmra.mrb[0].mxu0 %v626
        %v665 = vpop.f32.mrb[0].mxu0
        %v666 = vadd.f32 0.0, %v665
        %v667 = vpop.f32.mrb[0].mxu0
        %v668 = vpop.f32.mrb[0].mxu0
        %v669 = vpop.f32.mrb[0].mxu0
        %670 = vdwg.mxu0
        %v671 = vsel %vm480, %v522, -inf
        %672 = vmax.xlane.f32.xlu0 %v671
        %v673 = vpop.xlane.xlu0 %672
        %v674 = vsel %vm480, %v570, -inf
        %675 = vmax.xlane.f32.xlu0 %v674
        %v676 = vpop.xlane.xlu0 %675
        %v677 = vsel %vm480, %v618, -inf
        %678 = vmax.xlane.f32.xlu0 %v677
        %v679 = vpop.xlane.xlu0 %678
        %v680 = vsel %vm480, %v666, -inf
        %681 = vmax.xlane.f32.xlu0 %v680
        %v682 = vpop.xlane.xlu0 %681
        %v683 = vsub.f32 %v522, %v673
        %v684 = vsub.f32 %v570, %v676
        %v685 = vsub.f32 %v618, %v679
        %v686 = vsub.f32 %v666, %v682
        %v687 = vmul.f32 %v683, 1.442695
        %v688 = vpow.pop %v687
        %v689 = vmul.f32 %v684, 1.442695
        %v690 = vpow.pop %v689
        %v691 = vmul.f32 %v685, 1.442695
        %v692 = vpow.pop %v691
        %v693 = vmul.f32 %v686, 1.442695
        %v694 = vpow.pop %v693
        %v695 = vsel %vm480, %v688, 0.0
        %696 = vadd.xlane.f32.xlu0 %v695
        %v697 = vpop.xlane.xlu0 %696
        %v698 = vsel %vm480, %v690, 0.0
        %699 = vadd.xlane.f32.xlu0 %v698
        %v700 = vpop.xlane.xlu0 %699
        %v701 = vsel %vm480, %v692, 0.0
        %702 = vadd.xlane.f32.xlu0 %v701
        %v703 = vpop.xlane.xlu0 %702
        %v704 = vsel %vm480, %v694, 0.0
        %705 = vadd.xlane.f32.xlu0 %v704
        %v706 = vpop.xlane.xlu0 %705
        %v707 = vrcp.pop %v697
        %v708 = vrcp.pop %v700
        %v709 = vrcp.pop %v703
        %v710 = vrcp.pop %v706
        %v711 = vmul.f32 %v688, %v707
        %v712 = vmul.f32 %v690, %v708
        %v713 = vmul.f32 %v692, %v709
        %v714 = vmul.f32 %v694, %v710
        %v715 = vpack.c.bf16 %v711, %v711
        %v716 = vpack.c.bf16 %v712, %v712
        %v717 = vpack.c.bf16 %v713, %v713
        %v718 = vpack.c.bf16 %v714, %v714
        %719 = vrot.lane.b32.xlu0 %v470, 64
        %v720 = vpop.permute.xlu0 %719
        %v722 = vsel %vm480, %v715, 0
        %vm724 = vcmask 1043456
        %v726 = vsel %vm724, %v720, 0
        %728 = vmatprep.subr.bf16.mxu0 0
        %729 = vmatpush1.bf16.msra.mxu0 %v726
        %730 = vmatprep.subr.bf16.mxu0 0
        %731 = vmatpush1.bf16.msra.mxu0 0
        %732 = vmatprep.subr.bf16.mxu0 0
        %733 = vmatpush1.bf16.msra.mxu0 0
        %734 = vmatprep.subr.bf16.mxu0 0
        %735 = vmatpush1.bf16.msra.mxu0 0
        %736 = vmatprep.subr.bf16.mxu0 0
        %737 = vmatpush1.bf16.msra.mxu0 0
        %738 = vmatprep.subr.bf16.mxu0 0
        %739 = vmatpush1.bf16.msra.mxu0 0
        %740 = vmatprep.subr.bf16.mxu0 0
        %741 = vmatpush1.bf16.msra.mxu0 0
        %742 = vmatprep.subr.bf16.mxu0 0
        %743 = vmatpush1.bf16.msra.mxu0 0
        %744 = vmatprep.subr.bf16.mxu0 0
        %745 = vmatpush1.bf16.msra.mxu0 0
        %746 = vmatprep.subr.bf16.mxu0 0
        %747 = vmatpush1.bf16.msra.mxu0 0
        %748 = vmatprep.subr.bf16.mxu0 0
        %749 = vmatpush1.bf16.msra.mxu0 0
        %750 = vmatprep.subr.bf16.mxu0 0
        %751 = vmatpush1.bf16.msra.mxu0 0
        %752 = vmatprep.subr.bf16.mxu0 0
        %753 = vmatpush1.bf16.msra.mxu0 0
        %754 = vmatprep.subr.bf16.mxu0 0
        %755 = vmatpush1.bf16.msra.mxu0 0
        %756 = vmatprep.subr.bf16.mxu0 0
        %757 = vmatpush1.bf16.msra.mxu0 0
        %758 = vmatprep.subr.bf16.mxu0 0
        %759 = vmatpush1.bf16.msra.mxu0 0
        %760 = vmatprep.mubr.bf16.mxu0 0
        %761 = vmatmul.mubr.bf16.gmra.mrb[0].mxu0 %v722
        %v762 = vpop.f32.mrb[0].mxu0
        %v763 = vadd.f32 0.0, %v762
        %v764 = vpop.f32.mrb[0].mxu0
        %v765 = vpop.f32.mrb[0].mxu0
        %v766 = vpop.f32.mrb[0].mxu0
        %767 = vdwg.mxu0
        %768 = vrot.lane.b32.xlu0 %v473, 64
        %v769 = vpop.permute.xlu0 %768
        %v771 = vsel %vm480, %v716, 0
        %v774 = vsel %vm724, %v769, 0
        %776 = vmatprep.subr.bf16.mxu0 0
        %777 = vmatpush1.bf16.msra.mxu0 %v774
        %778 = vmatprep.subr.bf16.mxu0 0
        %779 = vmatpush1.bf16.msra.mxu0 0
        %780 = vmatprep.subr.bf16.mxu0 0
        %781 = vmatpush1.bf16.msra.mxu0 0
        %782 = vmatprep.subr.bf16.mxu0 0
        %783 = vmatpush1.bf16.msra.mxu0 0
        %784 = vmatprep.subr.bf16.mxu0 0
        %785 = vmatpush1.bf16.msra.mxu0 0
        %786 = vmatprep.subr.bf16.mxu0 0
        %787 = vmatpush1.bf16.msra.mxu0 0
        %788 = vmatprep.subr.bf16.mxu0 0
        %789 = vmatpush1.bf16.msra.mxu0 0
        %790 = vmatprep.subr.bf16.mxu0 0
        %791 = vmatpush1.bf16.msra.mxu0 0
        %792 = vmatprep.subr.bf16.mxu0 0
        %793 = vmatpush1.bf16.msra.mxu0 0
        %794 = vmatprep.subr.bf16.mxu0 0
        %795 = vmatpush1.bf16.msra.mxu0 0
        %796 = vmatprep.subr.bf16.mxu0 0
        %797 = vmatpush1.bf16.msra.mxu0 0
        %798 = vmatprep.subr.bf16.mxu0 0
        %799 = vmatpush1.bf16.msra.mxu0 0
        %800 = vmatprep.subr.bf16.mxu0 0
        %801 = vmatpush1.bf16.msra.mxu0 0
        %802 = vmatprep.subr.bf16.mxu0 0
        %803 = vmatpush1.bf16.msra.mxu0 0
        %804 = vmatprep.subr.bf16.mxu0 0
        %805 = vmatpush1.bf16.msra.mxu0 0
        %806 = vmatprep.subr.bf16.mxu0 0
        %807 = vmatpush1.bf16.msra.mxu0 0
        %808 = vmatprep.mubr.bf16.mxu0 0
        %809 = vmatmul.mubr.bf16.gmra.mrb[0].mxu0 %v771
        %v810 = vpop.f32.mrb[0].mxu0
        %v811 = vadd.f32 0.0, %v810
        %v812 = vpop.f32.mrb[0].mxu0
        %v813 = vpop.f32.mrb[0].mxu0
        %v814 = vpop.f32.mrb[0].mxu0
        %815 = vdwg.mxu0
        %816 = vrot.lane.b32.xlu0 %v475, 64
        %v817 = vpop.permute.xlu0 %816
        %v819 = vsel %vm480, %v717, 0
        %v822 = vsel %vm724, %v817, 0
        %824 = vmatprep.subr.bf16.mxu0 0
        %825 = vmatpush1.bf16.msra.mxu0 %v822
        %826 = vmatprep.subr.bf16.mxu0 0
        %827 = vmatpush1.bf16.msra.mxu0 0
        %828 = vmatprep.subr.bf16.mxu0 0
        %829 = vmatpush1.bf16.msra.mxu0 0
        %830 = vmatprep.subr.bf16.mxu0 0
        %831 = vmatpush1.bf16.msra.mxu0 0
        %832 = vmatprep.subr.bf16.mxu0 0
        %833 = vmatpush1.bf16.msra.mxu0 0
        %834 = vmatprep.subr.bf16.mxu0 0
        %835 = vmatpush1.bf16.msra.mxu0 0
        %836 = vmatprep.subr.bf16.mxu0 0
        %837 = vmatpush1.bf16.msra.mxu0 0
        %838 = vmatprep.subr.bf16.mxu0 0
        %839 = vmatpush1.bf16.msra.mxu0 0
        %840 = vmatprep.subr.bf16.mxu0 0
        %841 = vmatpush1.bf16.msra.mxu0 0
        %842 = vmatprep.subr.bf16.mxu0 0
        %843 = vmatpush1.bf16.msra.mxu0 0
        %844 = vmatprep.subr.bf16.mxu0 0
        %845 = vmatpush1.bf16.msra.mxu0 0
        %846 = vmatprep.subr.bf16.mxu0 0
        %847 = vmatpush1.bf16.msra.mxu0 0
        %848 = vmatprep.subr.bf16.mxu0 0
        %849 = vmatpush1.bf16.msra.mxu0 0
        %850 = vmatprep.subr.bf16.mxu0 0
        %851 = vmatpush1.bf16.msra.mxu0 0
        %852 = vmatprep.subr.bf16.mxu0 0
        %853 = vmatpush1.bf16.msra.mxu0 0
        %854 = vmatprep.subr.bf16.mxu0 0
        %855 = vmatpush1.bf16.msra.mxu0 0
        %856 = vmatprep.mubr.bf16.mxu0 0
        %857 = vmatmul.mubr.bf16.gmra.mrb[0].mxu0 %v819
        %v858 = vpop.f32.mrb[0].mxu0
        %v859 = vadd.f32 0.0, %v858
        %v860 = vpop.f32.mrb[0].mxu0
        %v861 = vpop.f32.mrb[0].mxu0
        %v862 = vpop.f32.mrb[0].mxu0
        %863 = vdwg.mxu0
        %864 = vrot.lane.b32.xlu0 %v477, 64
        %v865 = vpop.permute.xlu0 %864
        %v867 = vsel %vm480, %v718, 0
        %v870 = vsel %vm724, %v865, 0
        %872 = vmatprep.subr.bf16.mxu0 0
        %873 = vmatpush1.bf16.msra.mxu0 %v870
        %874 = vmatprep.subr.bf16.mxu0 0
        %875 = vmatpush1.bf16.msra.mxu0 0
        %876 = vmatprep.subr.bf16.mxu0 0
        %877 = vmatpush1.bf16.msra.mxu0 0
        %878 = vmatprep.subr.bf16.mxu0 0
        %879 = vmatpush1.bf16.msra.mxu0 0
        %880 = vmatprep.subr.bf16.mxu0 0
        %881 = vmatpush1.bf16.msra.mxu0 0
        %882 = vmatprep.subr.bf16.mxu0 0
        %883 = vmatpush1.bf16.msra.mxu0 0
        %884 = vmatprep.subr.bf16.mxu0 0
        %885 = vmatpush1.bf16.msra.mxu0 0
        %886 = vmatprep.subr.bf16.mxu0 0
        %887 = vmatpush1.bf16.msra.mxu0 0
        %888 = vmatprep.subr.bf16.mxu0 0
        %889 = vmatpush1.bf16.msra.mxu0 0
        %890 = vmatprep.subr.bf16.mxu0 0
        %891 = vmatpush1.bf16.msra.mxu0 0
        %892 = vmatprep.subr.bf16.mxu0 0
        %893 = vmatpush1.bf16.msra.mxu0 0
        %894 = vmatprep.subr.bf16.mxu0 0
        %895 = vmatpush1.bf16.msra.mxu0 0
        %896 = vmatprep.subr.bf16.mxu0 0
        %897 = vmatpush1.bf16.msra.mxu0 0
        %898 = vmatprep.subr.bf16.mxu0 0
        %899 = vmatpush1.bf16.msra.mxu0 0
        %900 = vmatprep.subr.bf16.mxu0 0
        %901 = vmatpush1.bf16.msra.mxu0 0
        %902 = vmatprep.subr.bf16.mxu0 0
        %903 = vmatpush1.bf16.msra.mxu0 0
        %904 = vmatprep.mubr.bf16.mxu0 0
        %905 = vmatmul.mubr.bf16.gmra.mrb[0].mxu0 %v867
        %v906 = vpop.f32.mrb[0].mxu0
        %v907 = vadd.f32 0.0, %v906
        %v908 = vpop.f32.mrb[0].mxu0
        %v909 = vpop.f32.mrb[0].mxu0
        %v910 = vpop.f32.mrb[0].mxu0
        %911 = vdwg.mxu0
        %913 = vrot.lane.b32.xlu0 %v811, 8
        %v914 = vpop.permute.xlu0 %913
        %917 = vrot.lane.b32.xlu0 %v859, 16
        %v918 = vpop.permute.xlu0 %917
        %921 = vrot.lane.b32.xlu0 %v907, 24
        %v922 = vpop.permute.xlu0 %921
        %v924 = vsel %vm480, %v763, %v914
        %vm925 = vcmask 130048
        %v926 = vsel %vm925, %v924, %v918
        %vm927 = vcmask 195584
        %v928 = vsel %vm927, %v926, %v922
        %v929 = vpack.c.bf16 %v928, %v928
        %v931 = vlaneseq
        %v932 = vshrl.u32 %v931, 7
        %v933 = vsub.s32 0, %v932
        %v934 = vrot.slane %v413, %v933
        %v940 = vunpack.c.l.b16 %v409
        %v941 = vunpack.c.l.b16 %v410
        %v942 = vunpack.c.l.b16 %v411
        %v943 = vunpack.c.l.b16 %v412
        %v944 = vpack.c.b16 %v941, %v940
        %v945 = vpack.c.b16 %v943, %v942
        %v949 = vsel %vm376, %v929, 0
        %951 = vmatprep.subr.bf16.mxu0 0
        %952 = vmatpush1.bf16.msra.mxu0 %v944
        %953 = vmatprep.subr.bf16.mxu0 0
        %954 = vmatpush1.bf16.msra.mxu0 %v945
        %955 = vmatprep.subr.bf16.mxu0 0
        %956 = vmatpush1.bf16.msra.mxu0 0
        %957 = vmatprep.subr.bf16.mxu0 0
        %958 = vmatpush1.bf16.msra.mxu0 0
        %959 = vmatprep.subr.bf16.mxu0 0
        %960 = vmatpush1.bf16.msra.mxu0 0
        %961 = vmatprep.subr.bf16.mxu0 0
        %962 = vmatpush1.bf16.msra.mxu0 0
        %963 = vmatprep.subr.bf16.mxu0 0
        %964 = vmatpush1.bf16.msra.mxu0 0
        %965 = vmatprep.subr.bf16.mxu0 0
        %966 = vmatpush1.bf16.msra.mxu0 0
        %967 = vmatprep.subr.bf16.mxu0 0
        %968 = vmatpush1.bf16.msra.mxu0 0
        %969 = vmatprep.subr.bf16.mxu0 0
        %970 = vmatpush1.bf16.msra.mxu0 0
        %971 = vmatprep.subr.bf16.mxu0 0
        %972 = vmatpush1.bf16.msra.mxu0 0
        %973 = vmatprep.subr.bf16.mxu0 0
        %974 = vmatpush1.bf16.msra.mxu0 0
        %975 = vmatprep.subr.bf16.mxu0 0
        %976 = vmatpush1.bf16.msra.mxu0 0
        %977 = vmatprep.subr.bf16.mxu0 0
        %978 = vmatpush1.bf16.msra.mxu0 0
        %979 = vmatprep.subr.bf16.mxu0 0
        %980 = vmatpush1.bf16.msra.mxu0 0
        %981 = vmatprep.subr.bf16.mxu0 0
        %982 = vmatpush1.bf16.msra.mxu0 0
        %983 = vmatprep.mubr.bf16.mxu0 0
        %984 = vmatmul.mubr.bf16.gmra.mrb[0].mxu0 %v949
        %v985 = vpop.f32.mrb[0].mxu0
        %v986 = vadd.f32 %v934, %v985
        %v987 = vpop.f32.mrb[0].mxu0
        %v988 = vpop.f32.mrb[0].mxu0
        %v989 = vpop.f32.mrb[0].mxu0
        %990 = vdwg.mxu0
        %991 = vst.msk [vmem:[%s364] sm:$0xff] %vm376, %v986
        %992 = vst.msk [vmem:[%s371] sm:$0xff] %vm376, %v404
        %s993 = sand.u32 %s170, 1
        %s994 = scalar_lea.sflag [#allocation4], %s993
        %s995 = sand.u32 %s170, 1
        %s996 = smul.addr %s995, 8
        %s997 = scalar_lea.vmem [#allocation13], %s996
        %s998 = sand.u32 %s196, 1
        %s999 = scalar_lea.sflag [#allocation15], %s998
        %s1000 = sand.u32 %s196, 1
        %s1001 = smul.addr %s1000, 8
        %s1002 = scalar_lea.vmem [#allocation14], %s1001
        // Predicated region
        $region69: #{tpu_custom_call.1} parent=43 // pred_check
          %p1003 = pneg %p180
        $region70: #{tpu_custom_call.1} parent=43 // pred_check_branch
          %1005 = sbr.rel (%p1003) target = $region72
        $region71: #{tpu_custom_call.1} parent=43 // pred_region
          %s1007 = ssub.s32 128, 128
          %1008 = vsyncadd %s994, %s1007
          %s1009 = smul.addr %s31, 128
          %s1010 = scalar_lea.hbm %s6, %s1009
          %s1012 = sshll.u32 %s997, 4
          %s1013 = int_to_ptr.vmem [resolvable:$true] %s1012
          %1015 = dma.vmem_to_hbm [thread:$0]  %s1013, 128, %s1010, %s994
        $region72: #{tpu_custom_call.1} parent=43 // pred_fallthru
          _
        // Predicated region
        $region73: #{tpu_custom_call.1} parent=43 // pred_check
          %p1016 = pneg %p206
        $region74: #{tpu_custom_call.1} parent=43 // pred_check_branch
          %1018 = sbr.rel (%p1016) target = $region76
        $region75: #{tpu_custom_call.1} parent=43 // pred_region
          %s1020 = ssub.s32 128, 128
          %1021 = vsyncadd %s999, %s1020
          %s1022 = smul.addr %s31, 128
          %s1023 = scalar_lea.hbm %s7, %s1022
          %s1025 = sshll.u32 %s1002, 4
          %s1026 = int_to_ptr.vmem [resolvable:$true] %s1025
          %1028 = dma.vmem_to_hbm [thread:$0]  %s1026, 128, %s1023, %s999
        $region76: #{tpu_custom_call.1} parent=43 // pred_fallthru
          _
      $region44: #{tpu_custom_call.1} parent=5 // pred_fallthru
        _
      %p1029 = scmp.le.s32.totalorder 2, %s26
      // Predicated region
      $region77: #{tpu_custom_call.1} parent=5 // pred_check
        %p1030 = pneg %p1029
      $region78: #{tpu_custom_call.1} parent=5 // pred_check_branch
        %1032 = sbr.rel (%p1030) target = $region80
      $region79: #{tpu_custom_call.1} parent=5 // pred_region
        %s1033 = ssub.s32 %s26, 2
        // Predicated region
        $region81: #{tpu_custom_call.1} parent=79 // pred_check
          %p1034 = pneg %p186
        $region82: #{tpu_custom_call.1} parent=79 // pred_check_branch
          %1036 = sbr.rel (%p1034) target = $region84
        $region83: #{tpu_custom_call.1} parent=79 // pred_region
          %s1037 = sand.u32 %s171, 1
          %s1038 = scalar_lea.sflag [#allocation4], %s1037
          %s1039 = sand.u32 %s171, 1
          %s1040 = smul.addr %s1039, 8
          %s1041 = scalar_lea.vmem [#allocation13], %s1040
          %1042 = dma.done %s1038, 128
        $region84: #{tpu_custom_call.1} parent=79 // pred_fallthru
          _
        // Predicated region
        $region85: #{tpu_custom_call.1} parent=79 // pred_check
          %p1043 = pneg %p212
        $region86: #{tpu_custom_call.1} parent=79 // pred_check_branch
          %1045 = sbr.rel (%p1043) target = $region88
        $region87: #{tpu_custom_call.1} parent=79 // pred_region
          %s1046 = sand.u32 %s197, 1
          %s1047 = scalar_lea.sflag [#allocation15], %s1046
          %s1048 = sand.u32 %s197, 1
          %s1049 = smul.addr %s1048, 8
          %s1050 = scalar_lea.vmem [#allocation14], %s1049
          %1051 = dma.done %s1047, 128
        $region88: #{tpu_custom_call.1} parent=79 // pred_fallthru
          _
      $region80: #{tpu_custom_call.1} parent=5 // pred_fallthru
        _
    $region6: #{tpu_custom_call.1} parent=1 // loop_footer
      %s30 = sadd.s32 1, %s26
    $region7: #{tpu_custom_call.1} parent=1 // loop_footer_branch
      %25 = sbr.rel target = $region3
    $region8: #{tpu_custom_call.1} parent=1 // loop_exit
      _
    %1052 = vsyncpa [#allocation3], 1
    %s1053 = scalar_lea.sflag [#allocation3], 1
    %1054 = vsyncpa %s1053, 1
    %1055 = vsyncpa [#allocation6], 1
    %1056 = vsyncpa [#allocation9], 1
    %1057 = vsyncpa [#allocation12], 1
    %1058 = vsyncpa [#allocation4], 1
    %s1059 = scalar_lea.sflag [#allocation4], 1
    %1060 = vsyncpa %s1059, 1
    %1061 = vsyncpa [#allocation15], 1
    %s1062 = scalar_lea.sflag [#allocation15], 1
    %1063 = vsyncpa %s1062, 1

</llo_original>
